<compile_context>
chip_gen: v7x
topology: tpu7x:2x2x1
jax: 0.10.0
libtpu: 0.0.40
codegen_flags: <defaults>
</compile_context>

<pallas_src>
import functools

import jax
import jax.numpy as jnp
from jax import lax
from jax.experimental import pallas as pl
from jax.experimental.pallas import tpu as pltpu


def _upsample_kernel(x_ref, w_ref, o_ref, *, k, w_out, eps):
    """One batch element (and one output-channel tile).

    x_ref: (Hpad, Cin, Wpad)  dilated + padded input, rows on the leading axis
    w_ref: (k*k, Ct, Cin)     per-tap (Ct, Cin) matrices (flipped / transposed)
    o_ref: (Hout, Ct, Wout)   written twice: raw conv rows, then norm + ReLU
    """
    h_out = o_ref.shape[0]
    c_t = o_ref.shape[1]

    # ---- pass 1: transposed conv as a k*k tap accumulation, one output row at
    #      a time. Each tap is a (Ct, Cin) x (Cin, Wout) matmul; the spatial
    #      width sits in the lane axis, so no in-kernel reshapes are needed. ---
    @pl.loop(0, h_out)
    def _(ho):
        acc = jnp.zeros((c_t, w_out), jnp.float32)
        for kh in range(k):
            xrow = x_ref[ho + kh]                                  # (Cin, Wpad)
            for kw in range(k):
                acc += jnp.dot(w_ref[kh * k + kw], xrow[:, kw:kw + w_out],
                               preferred_element_type=jnp.float32)
        o_ref[ho] = acc

    # ---- pass 2: InstanceNorm2d (affine=False, biased variance) + ReLU with
    #      one-pass statistics over the whole (Hout, Wout) plane per channel. --
    y = o_ref[...]                                                 # (Hout, Ct, Wout)
    inv_n = 1.0 / float(h_out * w_out)
    row_s = jnp.sum(y, axis=2, keepdims=True)                      # (Hout, Ct, 1)
    row_q = jnp.sum(y * y, axis=2, keepdims=True)
    mean = jnp.sum(row_s, axis=0, keepdims=True) * inv_n           # (1, Ct, 1)
    ex2 = jnp.sum(row_q, axis=0, keepdims=True) * inv_n
    var = jnp.maximum(ex2 - mean * mean, 0.0)                      # clamp E[y^2]-m^2
    o_ref[...] = jnp.maximum((y - mean) * lax.rsqrt(var + eps), 0.0)


def upsample_block(x, weight, bias=None, *, stride, padding, output_padding,
                   eps=1e-5, compute_dtype=jnp.float32, cout_tile=None):
    """ConvTranspose2d + InstanceNorm2d(affine=False) + ReLU.

    x:      (N, Cin, H, W)        NCHW, float32
    weight: (Cin, Cout, k, k)     PyTorch ConvTranspose2d layout
    bias:   (Cout,)               accepted for API parity; mathematically a
                                  no-op under InstanceNorm, so never DMA'd.
    """
    del bias  # cancelled by the per-channel mean subtraction of InstanceNorm.
    N, Cin, H, W = x.shape
    cin_w, Cout, k, k2 = weight.shape
    assert cin_w == Cin and k == k2
    s, p, op = stride, padding, output_padding

    Hout = (H - 1) * s - 2 * p + k + op
    Wout = (W - 1) * s - 2 * p + k + op
    pad_lo = k - 1 - p            # may be negative; lax.pad crops in that case
    pad_hi = k - 1 - p + op
    Hpad = Hout + k - 1
    Wpad = Wout + k - 1

    if cout_tile is None:
        cout_tile = Cout
    assert Cout % cout_tile == 0
    # Keep the second-minor block dim either full or sublane-aligned.
    assert cout_tile == Cout or cout_tile % 8 == 0
    n_ct = Cout // cout_tile

    # Dilate (interior padding) + pad/crop in ONE lax.pad, pre-transposed to
    # (N, H, Cin, W) so the kernel can fetch padded rows by first-axis index.
    xt = jnp.transpose(x, (0, 2, 1, 3)).astype(compute_dtype)      # (N, H, Cin, W)
    x_pad = lax.pad(xt, jnp.array(0, compute_dtype),
                    ((0, 0, 0), (pad_lo, pad_hi, s - 1),
                     (0, 0, 0), (pad_lo, pad_hi, s - 1)))          # (N, Hpad, Cin, Wpad)
    assert x_pad.shape == (N, Hpad, Cin, Wpad)

    # ConvTranspose2d == stride-1 conv over the dilated input with the weight
    # spatially flipped and in/out channels swapped. Per-tap matrices, t=kh*k+kw.
    w_taps = jnp.transpose(weight[:, :, ::-1, ::-1], (2, 3, 1, 0))  # (k, k, Cout, Cin)
    w_taps = w_taps.reshape(k * k, Cout, Cin).astype(compute_dtype)

    itemsize = jnp.dtype(compute_dtype).itemsize
    flops = 2 * N * Cout * Cin * k * k * Hout * Wout
    bytes_accessed = int(x_pad.size * itemsize + w_taps.size * itemsize
                         + N * Cout * Hout * Wout * 4)

    out_hcw = pl.pallas_call(
        functools.partial(_upsample_kernel, k=k, w_out=Wout, eps=eps),
        out_shape=jax.ShapeDtypeStruct((N, Hout, Cout, Wout), jnp.float32),
        grid=(N, n_ct),
        in_specs=[
            # x block index is constant along the channel-tile axis -> no re-DMA.
            pl.BlockSpec((None, Hpad, Cin, Wpad), lambda n, j: (n, 0, 0, 0)),
            pl.BlockSpec((k * k, cout_tile, Cin), lambda n, j: (0, j, 0)),
        ],
        out_specs=pl.BlockSpec((None, Hout, cout_tile, Wout),
                               lambda n, j: (n, 0, j, 0)),
        compiler_params=pltpu.CompilerParams(
            dimension_semantics=("parallel", "parallel"),
            vmem_limit_bytes=32 * 1024 * 1024),
        cost_estimate=pl.CostEstimate(flops=int(flops),
                                      transcendentals=int(N * Cout),
                                      bytes_accessed=bytes_accessed),
    )(x_pad, w_taps)

    # (N, Hout, Cout, Wout) -> NCHW.
    return jnp.transpose(out_hcw, (0, 2, 1, 3))


def _reference(x, weight, bias, *, stride, padding, output_padding, eps=1e-5):
    """Pure-JAX reference (same math as the PyTorch module, bias included)."""
    Cin, Cout, k, _ = weight.shape
    w_conv = jnp.transpose(weight, (1, 0, 2, 3))[:, :, ::-1, ::-1]
    pad_lo = k - 1 - padding
    pad_hi = k - 1 - padding + output_padding
    y = lax.conv_general_dilated(
        x, w_conv, window_strides=(1, 1),
        padding=[(pad_lo, pad_hi), (pad_lo, pad_hi)],
        lhs_dilation=(stride, stride),
        dimension_numbers=("NCHW", "OIHW", "NCHW"))
    y = y + bias.reshape(1, -1, 1, 1)
    mean = jnp.mean(y, axis=(2, 3), keepdims=True)
    var = jnp.mean((y - mean) ** 2, axis=(2, 3), keepdims=True)
    y = (y - mean) * lax.rsqrt(var + eps)
    return jnp.maximum(y, 0.0)


if __name__ == "__main__":
    # CycleGAN-style upsample: Cin=4 -> Cout=4, k=3, stride=2, pad=1, out_pad=1.
    N, Cin, Cout, H, W = 2, 4, 4, 16, 16
    k, stride, padding, output_padding = 3, 2, 1, 1

    key = jax.random.PRNGKey(0)
    kx, kw, kb = jax.random.split(key, 3)
    x = jax.random.normal(kx, (N, Cin, H, W), dtype=jnp.float32)
    weight = 0.1 * jax.random.normal(kw, (Cin, Cout, k, k), dtype=jnp.float32)
    bias = 0.1 * jax.random.normal(kb, (Cout,), dtype=jnp.float32)

    out = upsample_block(x, weight, bias, stride=stride, padding=padding,
                         output_padding=output_padding)
    out = jax.block_until_ready(out)

    ref = _reference(x, weight, bias, stride=stride, padding=padding,
                     output_padding=output_padding)
    assert out.shape == (N, Cout, 32, 32), out.shape
    assert jnp.allclose(out, ref, atol=1e-4, rtol=1e-4), \
        float(jnp.max(jnp.abs(out - ref)))

    print("KERNEL_OK")
</pallas_src>

<mosaic_0001>
module attributes {stable_mosaic.version = 11 : i64} {
  func.func @_upsample_kernel(%arg0: i32, %arg1: i32, %arg2: memref<1x34x4x34xf32, #tpu.memory_space<vmem>>, %arg3: memref<9x4x4xf32, #tpu.memory_space<vmem>>, %arg4: memref<1x32x4x32xf32, #tpu.memory_space<vmem>>) attributes {dimension_semantics = [#tpu.dimension_semantics<parallel>, #tpu.dimension_semantics<parallel>], iteration_bounds = array<i64: 2, 1>, scalar_prefetch = 0 : i64, scratch_operands = 0 : i64, tpu.core_type = #tpu.core_type<tc>, window_params = [{transform_indices = @transform_0, window_bounds = array<i64: 1, 34, 4, 34>}, {transform_indices = @transform_1, window_bounds = array<i64: 9, 4, 4>}, {transform_indices = @transform_2, window_bounds = array<i64: 1, 32, 4, 32>}]} {
    %c0_i32 = arith.constant 0 : i32
    %c32_i32 = arith.constant 32 : i32
    %0 = arith.addi %c0_i32, %c32_i32 : i32
    %c1_i32 = arith.constant 1 : i32
    scf.for %arg5 = %c0_i32 to %0 step %c1_i32  : i32 {
      %c1_i32_16 = arith.constant 1 : i32
      %32 = arith.muli %arg5, %c1_i32_16 : i32
      %c0_i32_17 = arith.constant 0 : i32
      %33 = arith.addi %c0_i32_17, %32 : i32
      %cst_18 = arith.constant 0.000000e+00 : f32
      %34 = vector.broadcast %cst_18 : f32 to vector<4x32xf32>
      %c0_i32_19 = arith.constant 0 : i32
      %35 = arith.addi %33, %c0_i32_19 : i32
      %c0_20 = arith.constant 0 : index
      %36 = arith.index_cast %35 : i32 to index
      %c0_21 = arith.constant 0 : index
      %c0_22 = arith.constant 0 : index
      %37 = vector.load %arg2[%c0_20, %36, %c0_21, %c0_22] : memref<1x34x4x34xf32, #tpu.memory_space<vmem>>, vector<1x1x4x34xf32>
      %38 = vector.shape_cast %37 : vector<1x1x4x34xf32> to vector<4x34xf32>
      %c0_23 = arith.constant 0 : index
      %c0_24 = arith.constant 0 : index
      %c0_25 = arith.constant 0 : index
      %39 = vector.load %arg3[%c0_23, %c0_24, %c0_25] : memref<9x4x4xf32, #tpu.memory_space<vmem>>, vector<1x4x4xf32>
      %40 = vector.shape_cast %39 : vector<1x4x4xf32> to vector<4x4xf32>
      %41 = vector.extract_strided_slice %38 {offsets = [0, 0], sizes = [4, 32], strides = [1, 1]} : vector<4x34xf32> to vector<4x32xf32>
      %cst_26 = arith.constant dense<0.000000e+00> : vector<4x32xf32>
      %42 = tpu.matmul %40, %41, %cst_26 {dimension_numbers = #tpu.dot_dimension_numbers<[1], [0], [0], [1], [0, 0, 1, 1], [], []>} : vector<4x4xf32>, vector<4x32xf32>, vector<4x32xf32> -> vector<4x32xf32>
      %43 = arith.addf %34, %42 : vector<4x32xf32>
      %c1 = arith.constant 1 : index
      %c0_27 = arith.constant 0 : index
      %c0_28 = arith.constant 0 : index
      %44 = vector.load %arg3[%c1, %c0_27, %c0_28] : memref<9x4x4xf32, #tpu.memory_space<vmem>>, vector<1x4x4xf32>
      %45 = vector.shape_cast %44 : vector<1x4x4xf32> to vector<4x4xf32>
      %46 = vector.extract_strided_slice %38 {offsets = [0, 1], sizes = [4, 32], strides = [1, 1]} : vector<4x34xf32> to vector<4x32xf32>
      %cst_29 = arith.constant dense<0.000000e+00> : vector<4x32xf32>
      %47 = tpu.matmul %45, %46, %cst_29 {dimension_numbers = #tpu.dot_dimension_numbers<[1], [0], [0], [1], [0, 0, 1, 1], [], []>} : vector<4x4xf32>, vector<4x32xf32>, vector<4x32xf32> -> vector<4x32xf32>
      %48 = arith.addf %43, %47 : vector<4x32xf32>
      %c2 = arith.constant 2 : index
      %c0_30 = arith.constant 0 : index
      %c0_31 = arith.constant 0 : index
      %49 = vector.load %arg3[%c2, %c0_30, %c0_31] : memref<9x4x4xf32, #tpu.memory_space<vmem>>, vector<1x4x4xf32>
      %50 = vector.shape_cast %49 : vector<1x4x4xf32> to vector<4x4xf32>
      %51 = vector.extract_strided_slice %38 {offsets = [0, 2], sizes = [4, 32], strides = [1, 1]} : vector<4x34xf32> to vector<4x32xf32>
      %cst_32 = arith.constant dense<0.000000e+00> : vector<4x32xf32>
      %52 = tpu.matmul %50, %51, %cst_32 {dimension_numbers = #tpu.dot_dimension_numbers<[1], [0], [0], [1], [0, 0, 1, 1], [], []>} : vector<4x4xf32>, vector<4x32xf32>, vector<4x32xf32> -> vector<4x32xf32>
      %53 = arith.addf %48, %52 : vector<4x32xf32>
      %c1_i32_33 = arith.constant 1 : i32
      %54 = arith.addi %33, %c1_i32_33 : i32
      %c0_34 = arith.constant 0 : index
      %55 = arith.index_cast %54 : i32 to index
      %c0_35 = arith.constant 0 : index
      %c0_36 = arith.constant 0 : index
      %56 = vector.load %arg2[%c0_34, %55, %c0_35, %c0_36] : memref<1x34x4x34xf32, #tpu.memory_space<vmem>>, vector<1x1x4x34xf32>
      %57 = vector.shape_cast %56 : vector<1x1x4x34xf32> to vector<4x34xf32>
      %c3 = arith.constant 3 : index
      %c0_37 = arith.constant 0 : index
      %c0_38 = arith.constant 0 : index
      %58 = vector.load %arg3[%c3, %c0_37, %c0_38] : memref<9x4x4xf32, #tpu.memory_space<vmem>>, vector<1x4x4xf32>
      %59 = vector.shape_cast %58 : vector<1x4x4xf32> to vector<4x4xf32>
      %60 = vector.extract_strided_slice %57 {offsets = [0, 0], sizes = [4, 32], strides = [1, 1]} : vector<4x34xf32> to vector<4x32xf32>
      %cst_39 = arith.constant dense<0.000000e+00> : vector<4x32xf32>
      %61 = tpu.matmul %59, %60, %cst_39 {dimension_numbers = #tpu.dot_dimension_numbers<[1], [0], [0], [1], [0, 0, 1, 1], [], []>} : vector<4x4xf32>, vector<4x32xf32>, vector<4x32xf32> -> vector<4x32xf32>
      %62 = arith.addf %53, %61 : vector<4x32xf32>
      %c4 = arith.constant 4 : index
      %c0_40 = arith.constant 0 : index
      %c0_41 = arith.constant 0 : index
      %63 = vector.load %arg3[%c4, %c0_40, %c0_41] : memref<9x4x4xf32, #tpu.memory_space<vmem>>, vector<1x4x4xf32>
      %64 = vector.shape_cast %63 : vector<1x4x4xf32> to vector<4x4xf32>
      %65 = vector.extract_strided_slice %57 {offsets = [0, 1], sizes = [4, 32], strides = [1, 1]} : vector<4x34xf32> to vector<4x32xf32>
      %cst_42 = arith.constant dense<0.000000e+00> : vector<4x32xf32>
      %66 = tpu.matmul %64, %65, %cst_42 {dimension_numbers = #tpu.dot_dimension_numbers<[1], [0], [0], [1], [0, 0, 1, 1], [], []>} : vector<4x4xf32>, vector<4x32xf32>, vector<4x32xf32> -> vector<4x32xf32>
      %67 = arith.addf %62, %66 : vector<4x32xf32>
      %c5 = arith.constant 5 : index
      %c0_43 = arith.constant 0 : index
      %c0_44 = arith.constant 0 : index
      %68 = vector.load %arg3[%c5, %c0_43, %c0_44] : memref<9x4x4xf32, #tpu.memory_space<vmem>>, vector<1x4x4xf32>
      %69 = vector.shape_cast %68 : vector<1x4x4xf32> to vector<4x4xf32>
      %70 = vector.extract_strided_slice %57 {offsets = [0, 2], sizes = [4, 32], strides = [1, 1]} : vector<4x34xf32> to vector<4x32xf32>
      %cst_45 = arith.constant dense<0.000000e+00> : vector<4x32xf32>
      %71 = tpu.matmul %69, %70, %cst_45 {dimension_numbers = #tpu.dot_dimension_numbers<[1], [0], [0], [1], [0, 0, 1, 1], [], []>} : vector<4x4xf32>, vector<4x32xf32>, vector<4x32xf32> -> vector<4x32xf32>
      %72 = arith.addf %67, %71 : vector<4x32xf32>
      %c2_i32 = arith.constant 2 : i32
      %73 = arith.addi %33, %c2_i32 : i32
      %c0_46 = arith.constant 0 : index
      %74 = arith.index_cast %73 : i32 to index
      %c0_47 = arith.constant 0 : index
      %c0_48 = arith.constant 0 : index
      %75 = vector.load %arg2[%c0_46, %74, %c0_47, %c0_48] : memref<1x34x4x34xf32, #tpu.memory_space<vmem>>, vector<1x1x4x34xf32>
      %76 = vector.shape_cast %75 : vector<1x1x4x34xf32> to vector<4x34xf32>
      %c6 = arith.constant 6 : index
      %c0_49 = arith.constant 0 : index
      %c0_50 = arith.constant 0 : index
      %77 = vector.load %arg3[%c6, %c0_49, %c0_50] : memref<9x4x4xf32, #tpu.memory_space<vmem>>, vector<1x4x4xf32>
      %78 = vector.shape_cast %77 : vector<1x4x4xf32> to vector<4x4xf32>
      %79 = vector.extract_strided_slice %76 {offsets = [0, 0], sizes = [4, 32], strides = [1, 1]} : vector<4x34xf32> to vector<4x32xf32>
      %cst_51 = arith.constant dense<0.000000e+00> : vector<4x32xf32>
      %80 = tpu.matmul %78, %79, %cst_51 {dimension_numbers = #tpu.dot_dimension_numbers<[1], [0], [0], [1], [0, 0, 1, 1], [], []>} : vector<4x4xf32>, vector<4x32xf32>, vector<4x32xf32> -> vector<4x32xf32>
      %81 = arith.addf %72, %80 : vector<4x32xf32>
      %c7 = arith.constant 7 : index
      %c0_52 = arith.constant 0 : index
      %c0_53 = arith.constant 0 : index
      %82 = vector.load %arg3[%c7, %c0_52, %c0_53] : memref<9x4x4xf32, #tpu.memory_space<vmem>>, vector<1x4x4xf32>
      %83 = vector.shape_cast %82 : vector<1x4x4xf32> to vector<4x4xf32>
      %84 = vector.extract_strided_slice %76 {offsets = [0, 1], sizes = [4, 32], strides = [1, 1]} : vector<4x34xf32> to vector<4x32xf32>
      %cst_54 = arith.constant dense<0.000000e+00> : vector<4x32xf32>
      %85 = tpu.matmul %83, %84, %cst_54 {dimension_numbers = #tpu.dot_dimension_numbers<[1], [0], [0], [1], [0, 0, 1, 1], [], []>} : vector<4x4xf32>, vector<4x32xf32>, vector<4x32xf32> -> vector<4x32xf32>
      %86 = arith.addf %81, %85 : vector<4x32xf32>
      %c8 = arith.constant 8 : index
      %c0_55 = arith.constant 0 : index
      %c0_56 = arith.constant 0 : index
      %87 = vector.load %arg3[%c8, %c0_55, %c0_56] : memref<9x4x4xf32, #tpu.memory_space<vmem>>, vector<1x4x4xf32>
      %88 = vector.shape_cast %87 : vector<1x4x4xf32> to vector<4x4xf32>
      %89 = vector.extract_strided_slice %76 {offsets = [0, 2], sizes = [4, 32], strides = [1, 1]} : vector<4x34xf32> to vector<4x32xf32>
      %cst_57 = arith.constant dense<0.000000e+00> : vector<4x32xf32>
      %90 = tpu.matmul %88, %89, %cst_57 {dimension_numbers = #tpu.dot_dimension_numbers<[1], [0], [0], [1], [0, 0, 1, 1], [], []>} : vector<4x4xf32>, vector<4x32xf32>, vector<4x32xf32> -> vector<4x32xf32>
      %91 = arith.addf %86, %90 : vector<4x32xf32>
      %c0_58 = arith.constant 0 : index
      %92 = arith.index_cast %33 : i32 to index
      %c0_59 = arith.constant 0 : index
      %c0_60 = arith.constant 0 : index
      %93 = vector.load %arg4[%c0_58, %92, %c0_59, %c0_60] : memref<1x32x4x32xf32, #tpu.memory_space<vmem>>, vector<1x1x4x32xf32>
      %94 = vector.shape_cast %93 : vector<1x1x4x32xf32> to vector<4x32xf32>
      %95 = vector.shape_cast %91 : vector<4x32xf32> to vector<1x1x4x32xf32>
      tpu.vector_store %arg4[%c0_58, %92, %c0_59, %c0_60], %95 {strides = array<i32>} : memref<1x32x4x32xf32, #tpu.memory_space<vmem>>, vector<1x1x4x32xf32>,
    }
    %c32_i32_0 = arith.constant 32 : i32
    %c0 = arith.constant 0 : index
    %c0_1 = arith.constant 0 : index
    %c0_2 = arith.constant 0 : index
    %c0_3 = arith.constant 0 : index
    %1 = vector.load %arg4[%c0, %c0_1, %c0_2, %c0_3] : memref<1x32x4x32xf32, #tpu.memory_space<vmem>>, vector<1x32x4x32xf32>
    %2 = vector.shape_cast %1 : vector<1x32x4x32xf32> to vector<32x4x32xf32>
    %cst = arith.constant dense<0.000000e+00> : vector<32x4xf32>
    %3 = vector.multi_reduction <add>, %2, %cst [2] : vector<32x4x32xf32> to vector<32x4xf32>
    %4 = vector.shape_cast %3 : vector<32x4xf32> to vector<32x4x1xf32>
    %5 = arith.mulf %2, %2 : vector<32x4x32xf32>
    %cst_4 = arith.constant dense<0.000000e+00> : vector<32x4xf32>
    %6 = vector.multi_reduction <add>, %5, %cst_4 [2] : vector<32x4x32xf32> to vector<32x4xf32>
    %7 = vector.shape_cast %6 : vector<32x4xf32> to vector<32x4x1xf32>
    %cst_5 = arith.constant dense<0.000000e+00> : vector<4x1xf32>
    %8 = vector.multi_reduction <add>, %4, %cst_5 [0] : vector<32x4x1xf32> to vector<4x1xf32>
    %9 = vector.shape_cast %8 : vector<4x1xf32> to vector<1x4x1xf32>
    %cst_6 = arith.constant 9.765625E-4 : f32
    %10 = vector.broadcast %cst_6 : f32 to vector<1x4x1xf32>
    %11 = arith.mulf %9, %10 : vector<1x4x1xf32>
    %cst_7 = arith.constant dense<0.000000e+00> : vector<4x1xf32>
    %12 = vector.multi_reduction <add>, %7, %cst_7 [0] : vector<32x4x1xf32> to vector<4x1xf32>
    %13 = vector.shape_cast %12 : vector<4x1xf32> to vector<1x4x1xf32>
    %cst_8 = arith.constant 9.765625E-4 : f32
    %14 = vector.broadcast %cst_8 : f32 to vector<1x4x1xf32>
    %15 = arith.mulf %13, %14 : vector<1x4x1xf32>
    %16 = arith.mulf %11, %11 : vector<1x4x1xf32>
    %17 = arith.subf %15, %16 : vector<1x4x1xf32>
    %cst_9 = arith.constant 0.000000e+00 : f32
    %18 = vector.broadcast %cst_9 : f32 to vector<1x4x1xf32>
    %19 = arith.maximumf %17, %18 : vector<1x4x1xf32>
    %20 = vector.broadcast %11 : vector<1x4x1xf32> to vector<32x4x32xf32>
    %21 = arith.subf %2, %20 : vector<32x4x32xf32>
    %cst_10 = arith.constant 9.99999974E-6 : f32
    %22 = vector.broadcast %cst_10 : f32 to vector<1x4x1xf32>
    %23 = arith.addf %19, %22 : vector<1x4x1xf32>
    %24 = math.rsqrt %23 : vector<1x4x1xf32>
    %25 = vector.broadcast %24 : vector<1x4x1xf32> to vector<32x4x32xf32>
    %26 = arith.mulf %21, %25 : vector<32x4x32xf32>
    %cst_11 = arith.constant 0.000000e+00 : f32
    %27 = vector.broadcast %cst_11 : f32 to vector<32x4x32xf32>
    %28 = arith.maximumf %26, %27 : vector<32x4x32xf32>
    %c0_12 = arith.constant 0 : index
    %c0_13 = arith.constant 0 : index
    %c0_14 = arith.constant 0 : index
    %c0_15 = arith.constant 0 : index
    %29 = vector.load %arg4[%c0_12, %c0_13, %c0_14, %c0_15] : memref<1x32x4x32xf32, #tpu.memory_space<vmem>>, vector<1x32x4x32xf32>
    %30 = vector.shape_cast %29 : vector<1x32x4x32xf32> to vector<32x4x32xf32>
    %31 = vector.shape_cast %28 : vector<32x4x32xf32> to vector<1x32x4x32xf32>
    tpu.vector_store %arg4[%c0_12, %c0_13, %c0_14, %c0_15], %31 {strides = array<i32>} : memref<1x32x4x32xf32, #tpu.memory_space<vmem>>, vector<1x32x4x32xf32>,
    return
  }
  func.func @transform_0(%arg0: i32, %arg1: i32) -> (i32, i32, i32, i32) {
    %c0_i32 = arith.constant 0 : i32
    %c0_i32_0 = arith.constant 0 : i32
    %c0_i32_1 = arith.constant 0 : i32
    %c0_i32_2 = arith.constant 0 : i32
    return %arg0, %c0_i32, %c0_i32_0, %c0_i32_1 : i32, i32, i32, i32
  }
  func.func @transform_1(%arg0: i32, %arg1: i32) -> (i32, i32, i32) {
    %c0_i32 = arith.constant 0 : i32
    %c0_i32_0 = arith.constant 0 : i32
    %c0_i32_1 = arith.constant 0 : i32
    return %c0_i32, %arg1, %c0_i32_0 : i32, i32, i32
  }
  func.func @transform_2(%arg0: i32, %arg1: i32) -> (i32, i32, i32, i32) {
    %c0_i32 = arith.constant 0 : i32
    %c0_i32_0 = arith.constant 0 : i32
    %c0_i32_1 = arith.constant 0 : i32
    return %arg0, %c0_i32, %arg1, %c0_i32_0 : i32, i32, i32, i32
  }
}

</mosaic_0001>

<llo_original>
// kernel: tpu_custom_call.1
$region0: #{tpu_custom_call.1}
  #allocation0 [shape = 'u32[]', space=smem, size = 0x4, offset = 0x4, fixed_abs, tag = 'smem constant byte address 0x4 - core index']
  #allocation1 [shape = 'u32[144,128]{1,0:T(1,128)}', space=vmem, size = 0x12000, scoped, tag = 'internal scratch']
  %s0 = inlined_call_operand.hbm [shape: f32[2,34,4,34], index: 0, kind: input, shape index: {}]
  %s1 = inlined_call_operand.vmem [shape: f32[9,4,4], index: 1, kind: input, shape index: {}]
  %s2 = inlined_call_operand.hbm [shape: f32[2,32,4,32], index: 2, kind: output, shape index: {}]
  %s3 = sld [smem:[#allocation0]]
  $region52: #{tpu_custom_call.1} parent=0
    _
  %s5 = ssub.s32 1, %s3
  %s6 = scalar_select 0, %s5, %s3
  $region1: #{tpu_custom_call.1} parent=0
    #allocation2 [shape = 'u8[139264]{0}', space=vmem, size = 0x22000, scoped, tag = 'input window, operand 0']
    #allocation3 [shape = 's32[2]{0}', space=sflag, size = 0x8, scoped, tag = 'scoped memory for tpu_custom_call.1']
    #allocation4 [shape = 's32[2]{0}', space=sflag, size = 0x8, scoped, tag = 'scoped memory for tpu_custom_call.1']
    #allocation5 [shape = 'u8[131072]{0}', space=vmem, size = 0x20000, scoped, tag = 'output window, operand 0']
    %7 = vsyncpa [#allocation3], 0
    %s8 = scalar_lea.sflag [#allocation3], 1
    %9 = vsyncpa %s8, 0
    %10 = vsyncpa [#allocation4], 0
    %s11 = scalar_lea.sflag [#allocation4], 1
    %12 = vsyncpa %s11, 0
    loop: start=0, step=1, limit=4
    $region2: #{tpu_custom_call.1} parent=1 // loop_pre_header
      _
    $region3: #{tpu_custom_call.1} parent=1 // loop_header
      %s14 = sphi 0, %s18
      %p15 = scmp.ge.s32.totalorder %s14, 4
      %s21 = sphi 0, %s33
      %s22 = sphi 0, %s29
      %s23 = sphi 0, %s21
      %s24 = sphi 0, %s22
      %s25 = sphi 0, %s23
      %s26 = sphi 0, %s24
      %s36 = sphi 0, %s38
      %s39 = sphi 0, %s36
      %s40 = sphi 0, %s39
      %s56 = sphi 0, %s40
      %s62 = sphi 0, %s64
      %s65 = sphi 0, %s62
      %s66 = sphi 0, %s65
      %s82 = sphi 0, %s66
      %s90 = sphi 0, %s92
      %s93 = sphi 0, %s90
      %s94 = sphi 0, %s93
      %s110 = sphi 0, %s94
    $region4: #{tpu_custom_call.1} parent=1 // loop_header_branch
      %17 = sbr.rel (%p15) target = $region8
    $region5: #{tpu_custom_call.1} parent=1 // loop_body
      %s19 = ssub.s32 %s14, 1
      %s20 = ssub.s32 %s14, 2
      %s27 = sadd.s32 1, %s22
      %p28 = scmp.ge.s32.totalorder %s27, 1
      %s29 = scalar_select %p28, 0, %s27
      %s30 = sadd.s32 1, %s21
      %s31 = scalar_select %p28, %s30, %s21
      %p32 = scmp.ge.s32.totalorder %s31, 2
      %s33 = scalar_select %p32, 0, %s31
      %s34 = ssub.s32 %s21, %s33
      %p35 = scmp.eq.s32.totalorder %s34, 0
      %s37 = sadd.s32 %s36, 1
      %s38 = scalar_select %p35, %s36, %s37
      %p41 = pneg %p35
      %p42 = scmp.eq.s32.totalorder %s14, 1
      %p43 = por %p41, %p42
      %p44 = scmp.ne.s32.totalorder %s36, %s39
      %p45 = scmp.eq.s32.totalorder %s14, 0
      %p46 = por %p44, %p45
      %p47 = scmp.ne.s32.totalorder %s36, %s39
      %p48 = scmp.eq.s32.totalorder %s19, 1
      %p49 = por %p47, %p48
      %p50 = scmp.ne.s32.totalorder %s39, %s40
      %p51 = scmp.eq.s32.totalorder %s19, 0
      %p52 = por %p50, %p51
      %p53 = scmp.ne.s32.totalorder %s39, %s40
      %p54 = scmp.eq.s32.totalorder %s20, 1
      %p55 = por %p53, %p54
      %p57 = scmp.ne.s32.totalorder %s40, %s56
      %p58 = scmp.eq.s32.totalorder %s20, 0
      %p59 = por %p57, %p58
      %s60 = ssub.s32 %s22, %s29
      %p61 = scmp.eq.s32.totalorder %s60, 0
      %s63 = sadd.s32 %s62, 1
      %s64 = scalar_select %p61, %s62, %s63
      %p67 = pneg %p61
      %p68 = scmp.eq.s32.totalorder %s14, 1
      %p69 = por %p67, %p68
      %p70 = scmp.ne.s32.totalorder %s62, %s65
      %p71 = scmp.eq.s32.totalorder %s14, 0
      %p72 = por %p70, %p71
      %p73 = scmp.ne.s32.totalorder %s62, %s65
      %p74 = scmp.eq.s32.totalorder %s19, 1
      %p75 = por %p73, %p74
      %p76 = scmp.ne.s32.totalorder %s65, %s66
      %p77 = scmp.eq.s32.totalorder %s19, 0
      %p78 = por %p76, %p77
      %p79 = scmp.ne.s32.totalorder %s65, %s66
      %p80 = scmp.eq.s32.totalorder %s20, 1
      %p81 = por %p79, %p80
      %p83 = scmp.ne.s32.totalorder %s66, %s82
      %p84 = scmp.eq.s32.totalorder %s20, 0
      %p85 = por %p83, %p84
      %s86 = ssub.s32 %s21, %s33
      %s87 = ssub.s32 %s22, %s29
      %s88 = sor.u32 %s86, %s87
      %p89 = scmp.eq.s32.totalorder %s88, 0
      %s91 = sadd.s32 %s90, 1
      %s92 = scalar_select %p89, %s90, %s91
      %p95 = pneg %p89
      %p96 = scmp.eq.s32.totalorder %s14, 1
      %p97 = por %p95, %p96
      %p98 = scmp.ne.s32.totalorder %s90, %s93
      %p99 = scmp.eq.s32.totalorder %s14, 0
      %p100 = por %p98, %p99
      %p101 = scmp.ne.s32.totalorder %s90, %s93
      %p102 = scmp.eq.s32.totalorder %s19, 1
      %p103 = por %p101, %p102
      %p104 = scmp.ne.s32.totalorder %s93, %s94
      %p105 = scmp.eq.s32.totalorder %s19, 0
      %p106 = por %p104, %p105
      %p107 = scmp.ne.s32.totalorder %s93, %s94
      %p108 = scmp.eq.s32.totalorder %s20, 1
      %p109 = por %p107, %p108
      %p111 = scmp.ne.s32.totalorder %s94, %s110
      %p112 = scmp.eq.s32.totalorder %s20, 0
      %p113 = por %p111, %p112
      %p114 = scmp.le.s32.totalorder 1, %s14
      %p115 = scmp.lt.s32.totalorder %s14, 3
      %p116 = pnand %p114, %p115
      %p117 = pneg %p116
      // Predicated region
      $region9: #{tpu_custom_call.1} parent=5 // pred_check
        _
      $region10: #{tpu_custom_call.1} parent=5 // pred_check_branch
        %119 = sbr.rel (%p116) target = $region12
      $region11: #{tpu_custom_call.1} parent=5 // pred_region
        %s120 = ssub.s32 %s14, 1
        // Predicated region
        $region13: #{tpu_custom_call.1} parent=11 // pred_check
          %p121 = pneg %p78
        $region14: #{tpu_custom_call.1} parent=11 // pred_check_branch
          %123 = sbr.rel (%p121) target = $region16
        $region15: #{tpu_custom_call.1} parent=11 // pred_region
          %p124 = scmp.lt.s32.totalorder %s24, 0
          %s125 = scalar_select %p124, %s24, 0
          %s126 = smul.addr %s125, 4
          %s127 = scalar_lea.vmem %s1, %s126
        $region16: #{tpu_custom_call.1} parent=11 // pred_fallthru
          _
      $region12: #{tpu_custom_call.1} parent=5 // pred_fallthru
        _
      %p128 = scmp.lt.s32.totalorder %s14, 2
      // Predicated region
      $region17: #{tpu_custom_call.1} parent=5 // pred_check
        %p129 = pneg %p128
      $region18: #{tpu_custom_call.1} parent=5 // pred_check_branch
        %131 = sbr.rel (%p129) target = $region20
      $region19: #{tpu_custom_call.1} parent=5 // pred_region
        // Predicated region
        $region21: #{tpu_custom_call.1} parent=19 // pred_check
          %p132 = pneg %p46
        $region22: #{tpu_custom_call.1} parent=19 // pred_check_branch
          %134 = sbr.rel (%p132) target = $region24
        $region23: #{tpu_custom_call.1} parent=19 // pred_region
          %s135 = sand.u32 %s36, 1
          %s136 = scalar_lea.sflag [#allocation3], %s135
          %s137 = sand.u32 %s36, 1
          %s138 = smul.addr %s137, 136
          %s139 = scalar_lea.vmem [#allocation2], %s138
          %s141 = ssub.s32 2176, 2176
          %142 = vsyncadd %s136, %s141
          %s143 = smul.addr %s21, 34
          %s144 = smul.addr %s143, 64
          %s145 = scalar_lea.hbm %s0, %s144
          %s146 = sshll.u32 %s139, 4
          %s147 = int_to_ptr.vmem [resolvable:$true] %s146
          %152 = dma.hbm_to_vmem [thread:$0]  %s145, 2176, %s147, %s136, 64, 64, 4
        $region24: #{tpu_custom_call.1} parent=19 // pred_fallthru
          _
      $region20: #{tpu_custom_call.1} parent=5 // pred_fallthru
        _
      %p153 = scmp.le.s32.totalorder 1, %s14
      %p154 = scmp.lt.s32.totalorder %s14, 3
      %p155 = pnand %p153, %p154
      %p156 = pneg %p155
      // Predicated region
      $region25: #{tpu_custom_call.1} parent=5 // pred_check
        _
      $region26: #{tpu_custom_call.1} parent=5 // pred_check_branch
        %158 = sbr.rel (%p155) target = $region28
      $region27: #{tpu_custom_call.1} parent=5 // pred_region
        %s159 = ssub.s32 %s14, 1
        %s160 = sand.u32 %s39, 1
        %s161 = scalar_lea.sflag [#allocation3], %s160
        %s162 = sand.u32 %s39, 1
        %s163 = smul.addr %s162, 136
        %s164 = scalar_lea.vmem [#allocation2], %s163
        // Predicated region
        $region29: #{tpu_custom_call.1} parent=27 // pred_check
          %p165 = pneg %p52
        $region30: #{tpu_custom_call.1} parent=27 // pred_check_branch
          %167 = sbr.rel (%p165) target = $region32
        $region31: #{tpu_custom_call.1} parent=27 // pred_region
          %168 = dma.done %s161, 2176
        $region32: #{tpu_custom_call.1} parent=27 // pred_fallthru
          _
        %s169 = sand.u32 %s39, 1
        %s170 = scalar_lea.sflag [#allocation3], %s169
        %s171 = sand.u32 %s39, 1
        %s172 = smul.addr %s171, 136
        %s173 = scalar_lea.vmem [#allocation2], %s172
        %p174 = pneg %p52
        %p175 = pneg %p49
        %p176 = scmp.lt.s32.totalorder %s24, 0
        %s177 = scalar_select %p176, %s24, 0
        %s178 = smul.addr %s177, 4
        %s179 = scalar_lea.vmem %s1, %s178
        %p180 = pneg %p78
        %p181 = pneg %p75
        %p182 = pneg %p106
        %p183 = pneg %p103
        %s184 = sand.u32 %s93, 1
        %s185 = scalar_lea.sflag [#allocation4], %s184
        %s186 = sand.u32 %s93, 1
        %s187 = smul.addr %s186, 128
        %s188 = scalar_lea.vmem [#allocation5], %s187
        %p189 = scmp.lt.s32.totalorder %s24, 0
        %s190 = scalar_select %p189, %s24, 0
        %s191 = smul.addr %s190, 4
        %s192 = scalar_lea.vmem %s1, %s191
        loop: start=0, step=1, limit=32
        $region33: #{tpu_custom_call.1} parent=27 // loop_pre_header
          _
        $region34: #{tpu_custom_call.1} parent=27 // loop_header
          %s194 = sphi 0, %s198
          %p195 = scmp.ge.s32.totalorder %s194, 32
        $region35: #{tpu_custom_call.1} parent=27 // loop_header_branch
          %197 = sbr.rel (%p195) target = $region39
        $region36: #{tpu_custom_call.1} parent=27 // loop_body
          %s199 = smul.u32 %s194, 4
          %s200 = scalar_lea.vmem %s164, %s199 [#allocation2]
          %v201 = vld [vmem:[%s200] sm:$0xf]
          %v202 = vld [vmem:[%s192] sm:$0xf]
          %s203 = scalar_lea.vmem %s192, 4
          %v204 = vld [vmem:[%s203] sm:$0xf]
          %206 = vrot.lane.b32.xlu0 %v201, 127
          %v207 = vpop.permute.xlu0 %206
          %vm208 = vcmask 31744
          %v210 = vsel %vm208, %v204, 0
          %vm212 = vcmask 1043456
          %v213 = vsel %vm212, %v207, 0
          %215 = vmatprep.subr.mxu0 0.0
          %216 = vmatpush1.msra.mxu0 %v213
          %217 = vmatprep.subr.mxu0 0.0
          %218 = vmatpush1.msra.mxu0 0.0
          %219 = vmatprep.subr.mxu0 0.0
          %220 = vmatpush1.msra.mxu0 0.0
          %221 = vmatprep.subr.mxu0 0.0
          %222 = vmatpush1.msra.mxu0 0.0
          %223 = vmatprep.subr.mxu0 0.0
          %224 = vmatpush1.msra.mxu0 0.0
          %225 = vmatprep.subr.mxu0 0.0
          %226 = vmatpush1.msra.mxu0 0.0
          %227 = vmatprep.subr.mxu0 0.0
          %228 = vmatpush1.msra.mxu0 0.0
          %229 = vmatprep.subr.mxu0 0.0
          %230 = vmatpush1.msra.mxu0 0.0
          %231 = vmatprep.subr.mxu0 0.0
          %232 = vmatpush1.msra.mxu0 0.0
          %233 = vmatprep.subr.mxu0 0.0
          %234 = vmatpush1.msra.mxu0 0.0
          %235 = vmatprep.subr.mxu0 0.0
          %236 = vmatpush1.msra.mxu0 0.0
          %237 = vmatprep.subr.mxu0 0.0
          %238 = vmatpush1.msra.mxu0 0.0
          %239 = vmatprep.subr.mxu0 0.0
          %240 = vmatpush1.msra.mxu0 0.0
          %241 = vmatprep.subr.mxu0 0.0
          %242 = vmatpush1.msra.mxu0 0.0
          %243 = vmatprep.subr.mxu0 0.0
          %244 = vmatpush1.msra.mxu0 0.0
          %245 = vmatprep.subr.mxu0 0.0
          %246 = vmatpush1.msra.mxu0 0.0
          %247 = vmatprep.subr.mxu0 0.0
          %248 = vmatpush1.msra.mxu0 0.0
          %249 = vmatprep.subr.mxu0 0.0
          %250 = vmatpush1.msra.mxu0 0.0
          %251 = vmatprep.subr.mxu0 0.0
          %252 = vmatpush1.msra.mxu0 0.0
          %253 = vmatprep.subr.mxu0 0.0
          %254 = vmatpush1.msra.mxu0 0.0
          %255 = vmatprep.subr.mxu0 0.0
          %256 = vmatpush1.msra.mxu0 0.0
          %257 = vmatprep.subr.mxu0 0.0
          %258 = vmatpush1.msra.mxu0 0.0
          %259 = vmatprep.subr.mxu0 0.0
          %260 = vmatpush1.msra.mxu0 0.0
          %261 = vmatprep.subr.mxu0 0.0
          %262 = vmatpush1.msra.mxu0 0.0
          %263 = vmatprep.subr.mxu0 0.0
          %264 = vmatpush1.msra.mxu0 0.0
          %265 = vmatprep.subr.mxu0 0.0
          %266 = vmatpush1.msra.mxu0 0.0
          %267 = vmatprep.subr.mxu0 0.0
          %268 = vmatpush1.msra.mxu0 0.0
          %269 = vmatprep.subr.mxu0 0.0
          %270 = vmatpush1.msra.mxu0 0.0
          %271 = vmatprep.subr.mxu0 0.0
          %272 = vmatpush1.msra.mxu0 0.0
          %273 = vmatprep.subr.mxu0 0.0
          %274 = vmatpush1.msra.mxu0 0.0
          %275 = vmatprep.subr.mxu0 0.0
          %276 = vmatpush1.msra.mxu0 0.0
          %277 = vmatprep.subr.mxu0 0.0
          %278 = vmatpush1.msra.mxu0 0.0
          %279 = vmatprep.mubr.f32.mxu0 0.0
          %280 = vmatmul.mubr.f32.gmra.mrb[0].mxu0 %v210
          %v281 = vpop.f32.mrb[0].mxu0
          %v282 = vadd.f32 0.0, %v281
          %v283 = vpop.f32.mrb[0].mxu0
          %284 = vdwg.mxu0
          %v286 = vsel %vm208, %v202, 0
          %v288 = vsel %vm212, %v201, 0
          %290 = vmatprep.subr.mxu0 0.0
          %291 = vmatpush1.msra.mxu0 %v288
          %292 = vmatprep.subr.mxu0 0.0
          %293 = vmatpush1.msra.mxu0 0.0
          %294 = vmatprep.subr.mxu0 0.0
          %295 = vmatpush1.msra.mxu0 0.0
          %296 = vmatprep.subr.mxu0 0.0
          %297 = vmatpush1.msra.mxu0 0.0
          %298 = vmatprep.subr.mxu0 0.0
          %299 = vmatpush1.msra.mxu0 0.0
          %300 = vmatprep.subr.mxu0 0.0
          %301 = vmatpush1.msra.mxu0 0.0
          %302 = vmatprep.subr.mxu0 0.0
          %303 = vmatpush1.msra.mxu0 0.0
          %304 = vmatprep.subr.mxu0 0.0
          %305 = vmatpush1.msra.mxu0 0.0
          %306 = vmatprep.subr.mxu0 0.0
          %307 = vmatpush1.msra.mxu0 0.0
          %308 = vmatprep.subr.mxu0 0.0
          %309 = vmatpush1.msra.mxu0 0.0
          %310 = vmatprep.subr.mxu0 0.0
          %311 = vmatpush1.msra.mxu0 0.0
          %312 = vmatprep.subr.mxu0 0.0
          %313 = vmatpush1.msra.mxu0 0.0
          %314 = vmatprep.subr.mxu0 0.0
          %315 = vmatpush1.msra.mxu0 0.0
          %316 = vmatprep.subr.mxu0 0.0
          %317 = vmatpush1.msra.mxu0 0.0
          %318 = vmatprep.subr.mxu0 0.0
          %319 = vmatpush1.msra.mxu0 0.0
          %320 = vmatprep.subr.mxu0 0.0
          %321 = vmatpush1.msra.mxu0 0.0
          %322 = vmatprep.subr.mxu0 0.0
          %323 = vmatpush1.msra.mxu0 0.0
          %324 = vmatprep.subr.mxu0 0.0
          %325 = vmatpush1.msra.mxu0 0.0
          %326 = vmatprep.subr.mxu0 0.0
          %327 = vmatpush1.msra.mxu0 0.0
          %328 = vmatprep.subr.mxu0 0.0
          %329 = vmatpush1.msra.mxu0 0.0
          %330 = vmatprep.subr.mxu0 0.0
          %331 = vmatpush1.msra.mxu0 0.0
          %332 = vmatprep.subr.mxu0 0.0
          %333 = vmatpush1.msra.mxu0 0.0
          %334 = vmatprep.subr.mxu0 0.0
          %335 = vmatpush1.msra.mxu0 0.0
          %336 = vmatprep.subr.mxu0 0.0
          %337 = vmatpush1.msra.mxu0 0.0
          %338 = vmatprep.subr.mxu0 0.0
          %339 = vmatpush1.msra.mxu0 0.0
          %340 = vmatprep.subr.mxu0 0.0
          %341 = vmatpush1.msra.mxu0 0.0
          %342 = vmatprep.subr.mxu0 0.0
          %343 = vmatpush1.msra.mxu0 0.0
          %344 = vmatprep.subr.mxu0 0.0
          %345 = vmatpush1.msra.mxu0 0.0
          %346 = vmatprep.subr.mxu0 0.0
          %347 = vmatpush1.msra.mxu0 0.0
          %348 = vmatprep.subr.mxu0 0.0
          %349 = vmatpush1.msra.mxu0 0.0
          %350 = vmatprep.subr.mxu0 0.0
          %351 = vmatpush1.msra.mxu0 0.0
          %352 = vmatprep.subr.mxu0 0.0
          %353 = vmatpush1.msra.mxu0 0.0
          %354 = vmatprep.mubr.f32.mxu0 0.0
          %355 = vmatmul.mubr.f32.gmra.mrb[0].mxu0 %v286
          %v356 = vpop.f32.mrb[0].mxu0
          %v357 = vadd.f32 %v282, %v356
          %v358 = vpop.f32.mrb[0].mxu0
          %359 = vdwg.mxu0
          %s360 = scalar_lea.vmem %s192, 8
          %v361 = vld [vmem:[%s360] sm:$0xf]
          %362 = vrot.lane.b32.xlu0 %v201, 126
          %v363 = vpop.permute.xlu0 %362
          %v365 = vsel %vm208, %v361, 0
          %v367 = vsel %vm212, %v363, 0
          %369 = vmatprep.subr.mxu0 0.0
          %370 = vmatpush1.msra.mxu0 %v367
          %371 = vmatprep.subr.mxu0 0.0
          %372 = vmatpush1.msra.mxu0 0.0
          %373 = vmatprep.subr.mxu0 0.0
          %374 = vmatpush1.msra.mxu0 0.0
          %375 = vmatprep.subr.mxu0 0.0
          %376 = vmatpush1.msra.mxu0 0.0
          %377 = vmatprep.subr.mxu0 0.0
          %378 = vmatpush1.msra.mxu0 0.0
          %379 = vmatprep.subr.mxu0 0.0
          %380 = vmatpush1.msra.mxu0 0.0
          %381 = vmatprep.subr.mxu0 0.0
          %382 = vmatpush1.msra.mxu0 0.0
          %383 = vmatprep.subr.mxu0 0.0
          %384 = vmatpush1.msra.mxu0 0.0
          %385 = vmatprep.subr.mxu0 0.0
          %386 = vmatpush1.msra.mxu0 0.0
          %387 = vmatprep.subr.mxu0 0.0
          %388 = vmatpush1.msra.mxu0 0.0
          %389 = vmatprep.subr.mxu0 0.0
          %390 = vmatpush1.msra.mxu0 0.0
          %391 = vmatprep.subr.mxu0 0.0
          %392 = vmatpush1.msra.mxu0 0.0
          %393 = vmatprep.subr.mxu0 0.0
          %394 = vmatpush1.msra.mxu0 0.0
          %395 = vmatprep.subr.mxu0 0.0
          %396 = vmatpush1.msra.mxu0 0.0
          %397 = vmatprep.subr.mxu0 0.0
          %398 = vmatpush1.msra.mxu0 0.0
          %399 = vmatprep.subr.mxu0 0.0
          %400 = vmatpush1.msra.mxu0 0.0
          %401 = vmatprep.subr.mxu0 0.0
          %402 = vmatpush1.msra.mxu0 0.0
          %403 = vmatprep.subr.mxu0 0.0
          %404 = vmatpush1.msra.mxu0 0.0
          %405 = vmatprep.subr.mxu0 0.0
          %406 = vmatpush1.msra.mxu0 0.0
          %407 = vmatprep.subr.mxu0 0.0
          %408 = vmatpush1.msra.mxu0 0.0
          %409 = vmatprep.subr.mxu0 0.0
          %410 = vmatpush1.msra.mxu0 0.0
          %411 = vmatprep.subr.mxu0 0.0
          %412 = vmatpush1.msra.mxu0 0.0
          %413 = vmatprep.subr.mxu0 0.0
          %414 = vmatpush1.msra.mxu0 0.0
          %415 = vmatprep.subr.mxu0 0.0
          %416 = vmatpush1.msra.mxu0 0.0
          %417 = vmatprep.subr.mxu0 0.0
          %418 = vmatpush1.msra.mxu0 0.0
          %419 = vmatprep.subr.mxu0 0.0
          %420 = vmatpush1.msra.mxu0 0.0
          %421 = vmatprep.subr.mxu0 0.0
          %422 = vmatpush1.msra.mxu0 0.0
          %423 = vmatprep.subr.mxu0 0.0
          %424 = vmatpush1.msra.mxu0 0.0
          %425 = vmatprep.subr.mxu0 0.0
          %426 = vmatpush1.msra.mxu0 0.0
          %427 = vmatprep.subr.mxu0 0.0
          %428 = vmatpush1.msra.mxu0 0.0
          %429 = vmatprep.subr.mxu0 0.0
          %430 = vmatpush1.msra.mxu0 0.0
          %431 = vmatprep.subr.mxu0 0.0
          %432 = vmatpush1.msra.mxu0 0.0
          %433 = vmatprep.mubr.f32.mxu0 0.0
          %434 = vmatmul.mubr.f32.gmra.mrb[0].mxu0 %v365
          %v435 = vpop.f32.mrb[0].mxu0
          %v436 = vadd.f32 0.0, %v435
          %v437 = vpop.f32.mrb[0].mxu0
          %438 = vdwg.mxu0
          %v439 = vadd.f32 %v357, %v436
          %s440 = sadd.s32 %s194, 1
          %s441 = smul.u32 %s440, 4
          %s442 = scalar_lea.vmem %s164, %s441 [#allocation2]
          %v443 = vld [vmem:[%s442] sm:$0xf]
          %s444 = scalar_lea.vmem %s192, 12
          %v445 = vld [vmem:[%s444] sm:$0xf]
          %v447 = vsel %vm208, %v445, 0
          %v450 = vsel %vm212, %v443, 0
          %452 = vmatprep.subr.mxu0 0.0
          %453 = vmatpush1.msra.mxu0 %v450
          %454 = vmatprep.subr.mxu0 0.0
          %455 = vmatpush1.msra.mxu0 0.0
          %456 = vmatprep.subr.mxu0 0.0
          %457 = vmatpush1.msra.mxu0 0.0
          %458 = vmatprep.subr.mxu0 0.0
          %459 = vmatpush1.msra.mxu0 0.0
          %460 = vmatprep.subr.mxu0 0.0
          %461 = vmatpush1.msra.mxu0 0.0
          %462 = vmatprep.subr.mxu0 0.0
          %463 = vmatpush1.msra.mxu0 0.0
          %464 = vmatprep.subr.mxu0 0.0
          %465 = vmatpush1.msra.mxu0 0.0
          %466 = vmatprep.subr.mxu0 0.0
          %467 = vmatpush1.msra.mxu0 0.0
          %468 = vmatprep.subr.mxu0 0.0
          %469 = vmatpush1.msra.mxu0 0.0
          %470 = vmatprep.subr.mxu0 0.0
          %471 = vmatpush1.msra.mxu0 0.0
          %472 = vmatprep.subr.mxu0 0.0
          %473 = vmatpush1.msra.mxu0 0.0
          %474 = vmatprep.subr.mxu0 0.0
          %475 = vmatpush1.msra.mxu0 0.0
          %476 = vmatprep.subr.mxu0 0.0
          %477 = vmatpush1.msra.mxu0 0.0
          %478 = vmatprep.subr.mxu0 0.0
          %479 = vmatpush1.msra.mxu0 0.0
          %480 = vmatprep.subr.mxu0 0.0
          %481 = vmatpush1.msra.mxu0 0.0
          %482 = vmatprep.subr.mxu0 0.0
          %483 = vmatpush1.msra.mxu0 0.0
          %484 = vmatprep.subr.mxu0 0.0
          %485 = vmatpush1.msra.mxu0 0.0
          %486 = vmatprep.subr.mxu0 0.0
          %487 = vmatpush1.msra.mxu0 0.0
          %488 = vmatprep.subr.mxu0 0.0
          %489 = vmatpush1.msra.mxu0 0.0
          %490 = vmatprep.subr.mxu0 0.0
          %491 = vmatpush1.msra.mxu0 0.0
          %492 = vmatprep.subr.mxu0 0.0
          %493 = vmatpush1.msra.mxu0 0.0
          %494 = vmatprep.subr.mxu0 0.0
          %495 = vmatpush1.msra.mxu0 0.0
          %496 = vmatprep.subr.mxu0 0.0
          %497 = vmatpush1.msra.mxu0 0.0
          %498 = vmatprep.subr.mxu0 0.0
          %499 = vmatpush1.msra.mxu0 0.0
          %500 = vmatprep.subr.mxu0 0.0
          %501 = vmatpush1.msra.mxu0 0.0
          %502 = vmatprep.subr.mxu0 0.0
          %503 = vmatpush1.msra.mxu0 0.0
          %504 = vmatprep.subr.mxu0 0.0
          %505 = vmatpush1.msra.mxu0 0.0
          %506 = vmatprep.subr.mxu0 0.0
          %507 = vmatpush1.msra.mxu0 0.0
          %508 = vmatprep.subr.mxu0 0.0
          %509 = vmatpush1.msra.mxu0 0.0
          %510 = vmatprep.subr.mxu0 0.0
          %511 = vmatpush1.msra.mxu0 0.0
          %512 = vmatprep.subr.mxu0 0.0
          %513 = vmatpush1.msra.mxu0 0.0
          %514 = vmatprep.subr.mxu0 0.0
          %515 = vmatpush1.msra.mxu0 0.0
          %516 = vmatprep.mubr.f32.mxu0 0.0
          %517 = vmatmul.mubr.f32.gmra.mrb[0].mxu0 %v447
          %v518 = vpop.f32.mrb[0].mxu0
          %v519 = vadd.f32 0.0, %v518
          %v520 = vpop.f32.mrb[0].mxu0
          %521 = vdwg.mxu0
          %v522 = vadd.f32 %v439, %v519
          %s523 = scalar_lea.vmem %s192, 16
          %v524 = vld [vmem:[%s523] sm:$0xf]
          %525 = vrot.lane.b32.xlu0 %v443, 127
          %v526 = vpop.permute.xlu0 %525
          %v528 = vsel %vm208, %v524, 0
          %v530 = vsel %vm212, %v526, 0
          %532 = vmatprep.subr.mxu0 0.0
          %533 = vmatpush1.msra.mxu0 %v530
          %534 = vmatprep.subr.mxu0 0.0
          %535 = vmatpush1.msra.mxu0 0.0
          %536 = vmatprep.subr.mxu0 0.0
          %537 = vmatpush1.msra.mxu0 0.0
          %538 = vmatprep.subr.mxu0 0.0
          %539 = vmatpush1.msra.mxu0 0.0
          %540 = vmatprep.subr.mxu0 0.0
          %541 = vmatpush1.msra.mxu0 0.0
          %542 = vmatprep.subr.mxu0 0.0
          %543 = vmatpush1.msra.mxu0 0.0
          %544 = vmatprep.subr.mxu0 0.0
          %545 = vmatpush1.msra.mxu0 0.0
          %546 = vmatprep.subr.mxu0 0.0
          %547 = vmatpush1.msra.mxu0 0.0
          %548 = vmatprep.subr.mxu0 0.0
          %549 = vmatpush1.msra.mxu0 0.0
          %550 = vmatprep.subr.mxu0 0.0
          %551 = vmatpush1.msra.mxu0 0.0
          %552 = vmatprep.subr.mxu0 0.0
          %553 = vmatpush1.msra.mxu0 0.0
          %554 = vmatprep.subr.mxu0 0.0
          %555 = vmatpush1.msra.mxu0 0.0
          %556 = vmatprep.subr.mxu0 0.0
          %557 = vmatpush1.msra.mxu0 0.0
          %558 = vmatprep.subr.mxu0 0.0
          %559 = vmatpush1.msra.mxu0 0.0
          %560 = vmatprep.subr.mxu0 0.0
          %561 = vmatpush1.msra.mxu0 0.0
          %562 = vmatprep.subr.mxu0 0.0
          %563 = vmatpush1.msra.mxu0 0.0
          %564 = vmatprep.subr.mxu0 0.0
          %565 = vmatpush1.msra.mxu0 0.0
          %566 = vmatprep.subr.mxu0 0.0
          %567 = vmatpush1.msra.mxu0 0.0
          %568 = vmatprep.subr.mxu0 0.0
          %569 = vmatpush1.msra.mxu0 0.0
          %570 = vmatprep.subr.mxu0 0.0
          %571 = vmatpush1.msra.mxu0 0.0
          %572 = vmatprep.subr.mxu0 0.0
          %573 = vmatpush1.msra.mxu0 0.0
          %574 = vmatprep.subr.mxu0 0.0
          %575 = vmatpush1.msra.mxu0 0.0
          %576 = vmatprep.subr.mxu0 0.0
          %577 = vmatpush1.msra.mxu0 0.0
          %578 = vmatprep.subr.mxu0 0.0
          %579 = vmatpush1.msra.mxu0 0.0
          %580 = vmatprep.subr.mxu0 0.0
          %581 = vmatpush1.msra.mxu0 0.0
          %582 = vmatprep.subr.mxu0 0.0
          %583 = vmatpush1.msra.mxu0 0.0
          %584 = vmatprep.subr.mxu0 0.0
          %585 = vmatpush1.msra.mxu0 0.0
          %586 = vmatprep.subr.mxu0 0.0
          %587 = vmatpush1.msra.mxu0 0.0
          %588 = vmatprep.subr.mxu0 0.0
          %589 = vmatpush1.msra.mxu0 0.0
          %590 = vmatprep.subr.mxu0 0.0
          %591 = vmatpush1.msra.mxu0 0.0
          %592 = vmatprep.subr.mxu0 0.0
          %593 = vmatpush1.msra.mxu0 0.0
          %594 = vmatprep.subr.mxu0 0.0
          %595 = vmatpush1.msra.mxu0 0.0
          %596 = vmatprep.mubr.f32.mxu0 0.0
          %597 = vmatmul.mubr.f32.gmra.mrb[0].mxu0 %v528
          %v598 = vpop.f32.mrb[0].mxu0
          %v599 = vadd.f32 0.0, %v598
          %v600 = vpop.f32.mrb[0].mxu0
          %601 = vdwg.mxu0
          %v602 = vadd.f32 %v522, %v599
          %s603 = scalar_lea.vmem %s192, 20
          %v604 = vld [vmem:[%s603] sm:$0xf]
          %605 = vrot.lane.b32.xlu0 %v443, 126
          %v606 = vpop.permute.xlu0 %605
          %v608 = vsel %vm208, %v604, 0
          %v610 = vsel %vm212, %v606, 0
          %612 = vmatprep.subr.mxu0 0.0
          %613 = vmatpush1.msra.mxu0 %v610
          %614 = vmatprep.subr.mxu0 0.0
          %615 = vmatpush1.msra.mxu0 0.0
          %616 = vmatprep.subr.mxu0 0.0
          %617 = vmatpush1.msra.mxu0 0.0
          %618 = vmatprep.subr.mxu0 0.0
          %619 = vmatpush1.msra.mxu0 0.0
          %620 = vmatprep.subr.mxu0 0.0
          %621 = vmatpush1.msra.mxu0 0.0
          %622 = vmatprep.subr.mxu0 0.0
          %623 = vmatpush1.msra.mxu0 0.0
          %624 = vmatprep.subr.mxu0 0.0
          %625 = vmatpush1.msra.mxu0 0.0
          %626 = vmatprep.subr.mxu0 0.0
          %627 = vmatpush1.msra.mxu0 0.0
          %628 = vmatprep.subr.mxu0 0.0
          %629 = vmatpush1.msra.mxu0 0.0
          %630 = vmatprep.subr.mxu0 0.0
          %631 = vmatpush1.msra.mxu0 0.0
          %632 = vmatprep.subr.mxu0 0.0
          %633 = vmatpush1.msra.mxu0 0.0
          %634 = vmatprep.subr.mxu0 0.0
          %635 = vmatpush1.msra.mxu0 0.0
          %636 = vmatprep.subr.mxu0 0.0
          %637 = vmatpush1.msra.mxu0 0.0
          %638 = vmatprep.subr.mxu0 0.0
          %639 = vmatpush1.msra.mxu0 0.0
          %640 = vmatprep.subr.mxu0 0.0
          %641 = vmatpush1.msra.mxu0 0.0
          %642 = vmatprep.subr.mxu0 0.0
          %643 = vmatpush1.msra.mxu0 0.0
          %644 = vmatprep.subr.mxu0 0.0
          %645 = vmatpush1.msra.mxu0 0.0
          %646 = vmatprep.subr.mxu0 0.0
          %647 = vmatpush1.msra.mxu0 0.0
          %648 = vmatprep.subr.mxu0 0.0
          %649 = vmatpush1.msra.mxu0 0.0
          %650 = vmatprep.subr.mxu0 0.0
          %651 = vmatpush1.msra.mxu0 0.0
          %652 = vmatprep.subr.mxu0 0.0
          %653 = vmatpush1.msra.mxu0 0.0
          %654 = vmatprep.subr.mxu0 0.0
          %655 = vmatpush1.msra.mxu0 0.0
          %656 = vmatprep.subr.mxu0 0.0
          %657 = vmatpush1.msra.mxu0 0.0
          %658 = vmatprep.subr.mxu0 0.0
          %659 = vmatpush1.msra.mxu0 0.0
          %660 = vmatprep.subr.mxu0 0.0
          %661 = vmatpush1.msra.mxu0 0.0
          %662 = vmatprep.subr.mxu0 0.0
          %663 = vmatpush1.msra.mxu0 0.0
          %664 = vmatprep.subr.mxu0 0.0
          %665 = vmatpush1.msra.mxu0 0.0
          %666 = vmatprep.subr.mxu0 0.0
          %667 = vmatpush1.msra.mxu0 0.0
          %668 = vmatprep.subr.mxu0 0.0
          %669 = vmatpush1.msra.mxu0 0.0
          %670 = vmatprep.subr.mxu0 0.0
          %671 = vmatpush1.msra.mxu0 0.0
          %672 = vmatprep.subr.mxu0 0.0
          %673 = vmatpush1.msra.mxu0 0.0
          %674 = vmatprep.subr.mxu0 0.0
          %675 = vmatpush1.msra.mxu0 0.0
          %676 = vmatprep.mubr.f32.mxu0 0.0
          %677 = vmatmul.mubr.f32.gmra.mrb[0].mxu0 %v608
          %v678 = vpop.f32.mrb[0].mxu0
          %v679 = vadd.f32 0.0, %v678
          %v680 = vpop.f32.mrb[0].mxu0
          %681 = vdwg.mxu0
          %v682 = vadd.f32 %v602, %v679
          %s683 = sadd.s32 %s194, 2
          %s684 = smul.u32 %s683, 4
          %s685 = scalar_lea.vmem %s164, %s684 [#allocation2]
          %v686 = vld [vmem:[%s685] sm:$0xf]
          %s687 = scalar_lea.vmem %s192, 24
          %v688 = vld [vmem:[%s687] sm:$0xf]
          %v690 = vsel %vm208, %v688, 0
          %v693 = vsel %vm212, %v686, 0
          %695 = vmatprep.subr.mxu0 0.0
          %696 = vmatpush1.msra.mxu0 %v693
          %697 = vmatprep.subr.mxu0 0.0
          %698 = vmatpush1.msra.mxu0 0.0
          %699 = vmatprep.subr.mxu0 0.0
          %700 = vmatpush1.msra.mxu0 0.0
          %701 = vmatprep.subr.mxu0 0.0
          %702 = vmatpush1.msra.mxu0 0.0
          %703 = vmatprep.subr.mxu0 0.0
          %704 = vmatpush1.msra.mxu0 0.0
          %705 = vmatprep.subr.mxu0 0.0
          %706 = vmatpush1.msra.mxu0 0.0
          %707 = vmatprep.subr.mxu0 0.0
          %708 = vmatpush1.msra.mxu0 0.0
          %709 = vmatprep.subr.mxu0 0.0
          %710 = vmatpush1.msra.mxu0 0.0
          %711 = vmatprep.subr.mxu0 0.0
          %712 = vmatpush1.msra.mxu0 0.0
          %713 = vmatprep.subr.mxu0 0.0
          %714 = vmatpush1.msra.mxu0 0.0
          %715 = vmatprep.subr.mxu0 0.0
          %716 = vmatpush1.msra.mxu0 0.0
          %717 = vmatprep.subr.mxu0 0.0
          %718 = vmatpush1.msra.mxu0 0.0
          %719 = vmatprep.subr.mxu0 0.0
          %720 = vmatpush1.msra.mxu0 0.0
          %721 = vmatprep.subr.mxu0 0.0
          %722 = vmatpush1.msra.mxu0 0.0
          %723 = vmatprep.subr.mxu0 0.0
          %724 = vmatpush1.msra.mxu0 0.0
          %725 = vmatprep.subr.mxu0 0.0
          %726 = vmatpush1.msra.mxu0 0.0
          %727 = vmatprep.subr.mxu0 0.0
          %728 = vmatpush1.msra.mxu0 0.0
          %729 = vmatprep.subr.mxu0 0.0
          %730 = vmatpush1.msra.mxu0 0.0
          %731 = vmatprep.subr.mxu0 0.0
          %732 = vmatpush1.msra.mxu0 0.0
          %733 = vmatprep.subr.mxu0 0.0
          %734 = vmatpush1.msra.mxu0 0.0
          %735 = vmatprep.subr.mxu0 0.0
          %736 = vmatpush1.msra.mxu0 0.0
          %737 = vmatprep.subr.mxu0 0.0
          %738 = vmatpush1.msra.mxu0 0.0
          %739 = vmatprep.subr.mxu0 0.0
          %740 = vmatpush1.msra.mxu0 0.0
          %741 = vmatprep.subr.mxu0 0.0
          %742 = vmatpush1.msra.mxu0 0.0
          %743 = vmatprep.subr.mxu0 0.0
          %744 = vmatpush1.msra.mxu0 0.0
          %745 = vmatprep.subr.mxu0 0.0
          %746 = vmatpush1.msra.mxu0 0.0
          %747 = vmatprep.subr.mxu0 0.0
          %748 = vmatpush1.msra.mxu0 0.0
          %749 = vmatprep.subr.mxu0 0.0
          %750 = vmatpush1.msra.mxu0 0.0
          %751 = vmatprep.subr.mxu0 0.0
          %752 = vmatpush1.msra.mxu0 0.0
          %753 = vmatprep.subr.mxu0 0.0
          %754 = vmatpush1.msra.mxu0 0.0
          %755 = vmatprep.subr.mxu0 0.0
          %756 = vmatpush1.msra.mxu0 0.0
          %757 = vmatprep.subr.mxu0 0.0
          %758 = vmatpush1.msra.mxu0 0.0
          %759 = vmatprep.mubr.f32.mxu0 0.0
          %760 = vmatmul.mubr.f32.gmra.mrb[0].mxu0 %v690
          %v761 = vpop.f32.mrb[0].mxu0
          %v762 = vadd.f32 0.0, %v761
          %v763 = vpop.f32.mrb[0].mxu0
          %764 = vdwg.mxu0
          %v765 = vadd.f32 %v682, %v762
          %s766 = scalar_lea.vmem %s192, 28
          %v767 = vld [vmem:[%s766] sm:$0xf]
          %768 = vrot.lane.b32.xlu0 %v686, 127
          %v769 = vpop.permute.xlu0 %768
          %v771 = vsel %vm208, %v767, 0
          %v773 = vsel %vm212, %v769, 0
          %775 = vmatprep.subr.mxu0 0.0
          %776 = vmatpush1.msra.mxu0 %v773
          %777 = vmatprep.subr.mxu0 0.0
          %778 = vmatpush1.msra.mxu0 0.0
          %779 = vmatprep.subr.mxu0 0.0
          %780 = vmatpush1.msra.mxu0 0.0
          %781 = vmatprep.subr.mxu0 0.0
          %782 = vmatpush1.msra.mxu0 0.0
          %783 = vmatprep.subr.mxu0 0.0
          %784 = vmatpush1.msra.mxu0 0.0
          %785 = vmatprep.subr.mxu0 0.0
          %786 = vmatpush1.msra.mxu0 0.0
          %787 = vmatprep.subr.mxu0 0.0
          %788 = vmatpush1.msra.mxu0 0.0
          %789 = vmatprep.subr.mxu0 0.0
          %790 = vmatpush1.msra.mxu0 0.0
          %791 = vmatprep.subr.mxu0 0.0
          %792 = vmatpush1.msra.mxu0 0.0
          %793 = vmatprep.subr.mxu0 0.0
          %794 = vmatpush1.msra.mxu0 0.0
          %795 = vmatprep.subr.mxu0 0.0
          %796 = vmatpush1.msra.mxu0 0.0
          %797 = vmatprep.subr.mxu0 0.0
          %798 = vmatpush1.msra.mxu0 0.0
          %799 = vmatprep.subr.mxu0 0.0
          %800 = vmatpush1.msra.mxu0 0.0
          %801 = vmatprep.subr.mxu0 0.0
          %802 = vmatpush1.msra.mxu0 0.0
          %803 = vmatprep.subr.mxu0 0.0
          %804 = vmatpush1.msra.mxu0 0.0
          %805 = vmatprep.subr.mxu0 0.0
          %806 = vmatpush1.msra.mxu0 0.0
          %807 = vmatprep.subr.mxu0 0.0
          %808 = vmatpush1.msra.mxu0 0.0
          %809 = vmatprep.subr.mxu0 0.0
          %810 = vmatpush1.msra.mxu0 0.0
          %811 = vmatprep.subr.mxu0 0.0
          %812 = vmatpush1.msra.mxu0 0.0
          %813 = vmatprep.subr.mxu0 0.0
          %814 = vmatpush1.msra.mxu0 0.0
          %815 = vmatprep.subr.mxu0 0.0
          %816 = vmatpush1.msra.mxu0 0.0
          %817 = vmatprep.subr.mxu0 0.0
          %818 = vmatpush1.msra.mxu0 0.0
          %819 = vmatprep.subr.mxu0 0.0
          %820 = vmatpush1.msra.mxu0 0.0
          %821 = vmatprep.subr.mxu0 0.0
          %822 = vmatpush1.msra.mxu0 0.0
          %823 = vmatprep.subr.mxu0 0.0
          %824 = vmatpush1.msra.mxu0 0.0
          %825 = vmatprep.subr.mxu0 0.0
          %826 = vmatpush1.msra.mxu0 0.0
          %827 = vmatprep.subr.mxu0 0.0
          %828 = vmatpush1.msra.mxu0 0.0
          %829 = vmatprep.subr.mxu0 0.0
          %830 = vmatpush1.msra.mxu0 0.0
          %831 = vmatprep.subr.mxu0 0.0
          %832 = vmatpush1.msra.mxu0 0.0
          %833 = vmatprep.subr.mxu0 0.0
          %834 = vmatpush1.msra.mxu0 0.0
          %835 = vmatprep.subr.mxu0 0.0
          %836 = vmatpush1.msra.mxu0 0.0
          %837 = vmatprep.subr.mxu0 0.0
          %838 = vmatpush1.msra.mxu0 0.0
          %839 = vmatprep.mubr.f32.mxu0 0.0
          %840 = vmatmul.mubr.f32.gmra.mrb[0].mxu0 %v771
          %v841 = vpop.f32.mrb[0].mxu0
          %v842 = vadd.f32 0.0, %v841
          %v843 = vpop.f32.mrb[0].mxu0
          %844 = vdwg.mxu0
          %v845 = vadd.f32 %v765, %v842
          %s846 = scalar_lea.vmem %s192, 32
          %v847 = vld [vmem:[%s846] sm:$0xf]
          %848 = vrot.lane.b32.xlu0 %v686, 126
          %v849 = vpop.permute.xlu0 %848
          %v851 = vsel %vm208, %v847, 0
          %v853 = vsel %vm212, %v849, 0
          %855 = vmatprep.subr.mxu0 0.0
          %856 = vmatpush1.msra.mxu0 %v853
          %857 = vmatprep.subr.mxu0 0.0
          %858 = vmatpush1.msra.mxu0 0.0
          %859 = vmatprep.subr.mxu0 0.0
          %860 = vmatpush1.msra.mxu0 0.0
          %861 = vmatprep.subr.mxu0 0.0
          %862 = vmatpush1.msra.mxu0 0.0
          %863 = vmatprep.subr.mxu0 0.0
          %864 = vmatpush1.msra.mxu0 0.0
          %865 = vmatprep.subr.mxu0 0.0
          %866 = vmatpush1.msra.mxu0 0.0
          %867 = vmatprep.subr.mxu0 0.0
          %868 = vmatpush1.msra.mxu0 0.0
          %869 = vmatprep.subr.mxu0 0.0
          %870 = vmatpush1.msra.mxu0 0.0
          %871 = vmatprep.subr.mxu0 0.0
          %872 = vmatpush1.msra.mxu0 0.0
          %873 = vmatprep.subr.mxu0 0.0
          %874 = vmatpush1.msra.mxu0 0.0
          %875 = vmatprep.subr.mxu0 0.0
          %876 = vmatpush1.msra.mxu0 0.0
          %877 = vmatprep.subr.mxu0 0.0
          %878 = vmatpush1.msra.mxu0 0.0
          %879 = vmatprep.subr.mxu0 0.0
          %880 = vmatpush1.msra.mxu0 0.0
          %881 = vmatprep.subr.mxu0 0.0
          %882 = vmatpush1.msra.mxu0 0.0
          %883 = vmatprep.subr.mxu0 0.0
          %884 = vmatpush1.msra.mxu0 0.0
          %885 = vmatprep.subr.mxu0 0.0
          %886 = vmatpush1.msra.mxu0 0.0
          %887 = vmatprep.subr.mxu0 0.0
          %888 = vmatpush1.msra.mxu0 0.0
          %889 = vmatprep.subr.mxu0 0.0
          %890 = vmatpush1.msra.mxu0 0.0
          %891 = vmatprep.subr.mxu0 0.0
          %892 = vmatpush1.msra.mxu0 0.0
          %893 = vmatprep.subr.mxu0 0.0
          %894 = vmatpush1.msra.mxu0 0.0
          %895 = vmatprep.subr.mxu0 0.0
          %896 = vmatpush1.msra.mxu0 0.0
          %897 = vmatprep.subr.mxu0 0.0
          %898 = vmatpush1.msra.mxu0 0.0
          %899 = vmatprep.subr.mxu0 0.0
          %900 = vmatpush1.msra.mxu0 0.0
          %901 = vmatprep.subr.mxu0 0.0
          %902 = vmatpush1.msra.mxu0 0.0
          %903 = vmatprep.subr.mxu0 0.0
          %904 = vmatpush1.msra.mxu0 0.0
          %905 = vmatprep.subr.mxu0 0.0
          %906 = vmatpush1.msra.mxu0 0.0
          %907 = vmatprep.subr.mxu0 0.0
          %908 = vmatpush1.msra.mxu0 0.0
          %909 = vmatprep.subr.mxu0 0.0
          %910 = vmatpush1.msra.mxu0 0.0
          %911 = vmatprep.subr.mxu0 0.0
          %912 = vmatpush1.msra.mxu0 0.0
          %913 = vmatprep.subr.mxu0 0.0
          %914 = vmatpush1.msra.mxu0 0.0
          %915 = vmatprep.subr.mxu0 0.0
          %916 = vmatpush1.msra.mxu0 0.0
          %917 = vmatprep.subr.mxu0 0.0
          %918 = vmatpush1.msra.mxu0 0.0
          %919 = vmatprep.mubr.f32.mxu0 0.0
          %920 = vmatmul.mubr.f32.gmra.mrb[0].mxu0 %v851
          %v921 = vpop.f32.mrb[0].mxu0
          %v922 = vadd.f32 0.0, %v921
          %v923 = vpop.f32.mrb[0].mxu0
          %924 = vdwg.mxu0
          %v925 = vadd.f32 %v845, %v922
          %s926 = scalar_lea.vmem %s188, %s199 [#allocation5]
          %vm927 = vcmask 257024
          %928 = vst.msk [vmem:[%s926] sm:$0xf] %vm927, %v925
        $region37: #{tpu_custom_call.1} parent=27 // loop_footer
          %s198 = sadd.s32 1, %s194
        $region38: #{tpu_custom_call.1} parent=27 // loop_footer_branch
          %193 = sbr.rel target = $region34
        $region39: #{tpu_custom_call.1} parent=27 // loop_exit
          _
        %v929 = vld [vmem:[%s188] sm:$0xf]
        %v930 = vld [vmem:[%s188 + $0x4] sm:$0xf]
        %v931 = vld [vmem:[%s188 + $0x8] sm:$0xf]
        %v932 = vld [vmem:[%s188 + $0xc] sm:$0xf]
        %v933 = vld [vmem:[%s188 + $0x10] sm:$0xf]
        %v934 = vld [vmem:[%s188 + $0x14] sm:$0xf]
        %v935 = vld [vmem:[%s188 + $0x18] sm:$0xf]
        %v936 = vld [vmem:[%s188 + $0x1c] sm:$0xf]
        %v937 = vld [vmem:[%s188 + $0x20] sm:$0xf]
        %v938 = vld [vmem:[%s188 + $0x24] sm:$0xf]
        %v939 = vld [vmem:[%s188 + $0x28] sm:$0xf]
        %v940 = vld [vmem:[%s188 + $0x2c] sm:$0xf]
        %v941 = vld [vmem:[%s188 + $0x30] sm:$0xf]
        %v942 = vld [vmem:[%s188 + $0x34] sm:$0xf]
        %v943 = vld [vmem:[%s188 + $0x38] sm:$0xf]
        %v944 = vld [vmem:[%s188 + $0x3c] sm:$0xf]
        %v945 = vld [vmem:[%s188 + $0x40] sm:$0xf]
        %v946 = vld [vmem:[%s188 + $0x44] sm:$0xf]
        %v947 = vld [vmem:[%s188 + $0x48] sm:$0xf]
        %v948 = vld [vmem:[%s188 + $0x4c] sm:$0xf]
        %v949 = vld [vmem:[%s188 + $0x50] sm:$0xf]
        %v950 = vld [vmem:[%s188 + $0x54] sm:$0xf]
        %v951 = vld [vmem:[%s188 + $0x58] sm:$0xf]
        %v952 = vld [vmem:[%s188 + $0x5c] sm:$0xf]
        %v953 = vld [vmem:[%s188 + $0x60] sm:$0xf]
        %v954 = vld [vmem:[%s188 + $0x64] sm:$0xf]
        %v955 = vld [vmem:[%s188 + $0x68] sm:$0xf]
        %v956 = vld [vmem:[%s188 + $0x6c] sm:$0xf]
        %v957 = vld [vmem:[%s188 + $0x70] sm:$0xf]
        %v958 = vld [vmem:[%s188 + $0x74] sm:$0xf]
        %v959 = vld [vmem:[%s188 + $0x78] sm:$0xf]
        %v960 = vld [vmem:[%s188 + $0x7c] sm:$0xf]
        %vm961 = vcmask 257024
        %v962 = vsel %vm961, %v929, 0.0
        %963 = vadd.xlane.f32.xlu0 %v962
        %v964 = vpop.xlane.xlu0 %963
        %v965 = vsel %vm961, %v930, 0.0
        %966 = vadd.xlane.f32.xlu0 %v965
        %v967 = vpop.xlane.xlu0 %966
        %v968 = vsel %vm961, %v931, 0.0
        %969 = vadd.xlane.f32.xlu0 %v968
        %v970 = vpop.xlane.xlu0 %969
        %v971 = vsel %vm961, %v932, 0.0
        %972 = vadd.xlane.f32.xlu0 %v971
        %v973 = vpop.xlane.xlu0 %972
        %v974 = vsel %vm961, %v933, 0.0
        %975 = vadd.xlane.f32.xlu0 %v974
        %v976 = vpop.xlane.xlu0 %975
        %v977 = vsel %vm961, %v934, 0.0
        %978 = vadd.xlane.f32.xlu0 %v977
        %v979 = vpop.xlane.xlu0 %978
        %v980 = vsel %vm961, %v935, 0.0
        %981 = vadd.xlane.f32.xlu0 %v980
        %v982 = vpop.xlane.xlu0 %981
        %v983 = vsel %vm961, %v936, 0.0
        %984 = vadd.xlane.f32.xlu0 %v983
        %v985 = vpop.xlane.xlu0 %984
        %v986 = vsel %vm961, %v937, 0.0
        %987 = vadd.xlane.f32.xlu0 %v986
        %v988 = vpop.xlane.xlu0 %987
        %v989 = vsel %vm961, %v938, 0.0
        %990 = vadd.xlane.f32.xlu0 %v989
        %v991 = vpop.xlane.xlu0 %990
        %v992 = vsel %vm961, %v939, 0.0
        %993 = vadd.xlane.f32.xlu0 %v992
        %v994 = vpop.xlane.xlu0 %993
        %v995 = vsel %vm961, %v940, 0.0
        %996 = vadd.xlane.f32.xlu0 %v995
        %v997 = vpop.xlane.xlu0 %996
        %v998 = vsel %vm961, %v941, 0.0
        %999 = vadd.xlane.f32.xlu0 %v998
        %v1000 = vpop.xlane.xlu0 %999
        %v1001 = vsel %vm961, %v942, 0.0
        %1002 = vadd.xlane.f32.xlu0 %v1001
        %v1003 = vpop.xlane.xlu0 %1002
        %v1004 = vsel %vm961, %v943, 0.0
        %1005 = vadd.xlane.f32.xlu0 %v1004
        %v1006 = vpop.xlane.xlu0 %1005
        %v1007 = vsel %vm961, %v944, 0.0
        %1008 = vadd.xlane.f32.xlu0 %v1007
        %v1009 = vpop.xlane.xlu0 %1008
        %v1010 = vsel %vm961, %v945, 0.0
        %1011 = vadd.xlane.f32.xlu0 %v1010
        %v1012 = vpop.xlane.xlu0 %1011
        %v1013 = vsel %vm961, %v946, 0.0
        %1014 = vadd.xlane.f32.xlu0 %v1013
        %v1015 = vpop.xlane.xlu0 %1014
        %v1016 = vsel %vm961, %v947, 0.0
        %1017 = vadd.xlane.f32.xlu0 %v1016
        %v1018 = vpop.xlane.xlu0 %1017
        %v1019 = vsel %vm961, %v948, 0.0
        %1020 = vadd.xlane.f32.xlu0 %v1019
        %v1021 = vpop.xlane.xlu0 %1020
        %v1022 = vsel %vm961, %v949, 0.0
        %1023 = vadd.xlane.f32.xlu0 %v1022
        %v1024 = vpop.xlane.xlu0 %1023
        %v1025 = vsel %vm961, %v950, 0.0
        %1026 = vadd.xlane.f32.xlu0 %v1025
        %v1027 = vpop.xlane.xlu0 %1026
        %v1028 = vsel %vm961, %v951, 0.0
        %1029 = vadd.xlane.f32.xlu0 %v1028
        %v1030 = vpop.xlane.xlu0 %1029
        %v1031 = vsel %vm961, %v952, 0.0
        %1032 = vadd.xlane.f32.xlu0 %v1031
        %v1033 = vpop.xlane.xlu0 %1032
        %v1034 = vsel %vm961, %v953, 0.0
        %1035 = vadd.xlane.f32.xlu0 %v1034
        %v1036 = vpop.xlane.xlu0 %1035
        %v1037 = vsel %vm961, %v954, 0.0
        %1038 = vadd.xlane.f32.xlu0 %v1037
        %v1039 = vpop.xlane.xlu0 %1038
        %v1040 = vsel %vm961, %v955, 0.0
        %1041 = vadd.xlane.f32.xlu0 %v1040
        %v1042 = vpop.xlane.xlu0 %1041
        %v1043 = vsel %vm961, %v956, 0.0
        %1044 = vadd.xlane.f32.xlu0 %v1043
        %v1045 = vpop.xlane.xlu0 %1044
        %v1046 = vsel %vm961, %v957, 0.0
        %1047 = vadd.xlane.f32.xlu0 %v1046
        %v1048 = vpop.xlane.xlu0 %1047
        %v1049 = vsel %vm961, %v958, 0.0
        %1050 = vadd.xlane.f32.xlu0 %v1049
        %v1051 = vpop.xlane.xlu0 %1050
        %v1052 = vsel %vm961, %v959, 0.0
        %1053 = vadd.xlane.f32.xlu0 %v1052
        %v1054 = vpop.xlane.xlu0 %1053
        %v1055 = vsel %vm961, %v960, 0.0
        %1056 = vadd.xlane.f32.xlu0 %v1055
        %v1057 = vpop.xlane.xlu0 %1056
        %v1058 = vmul.f32 %v929, %v929
        %v1059 = vmul.f32 %v930, %v930
        %v1060 = vmul.f32 %v931, %v931
        %v1061 = vmul.f32 %v932, %v932
        %v1062 = vmul.f32 %v933, %v933
        %v1063 = vmul.f32 %v934, %v934
        %v1064 = vmul.f32 %v935, %v935
        %v1065 = vmul.f32 %v936, %v936
        %v1066 = vmul.f32 %v937, %v937
        %v1067 = vmul.f32 %v938, %v938
        %v1068 = vmul.f32 %v939, %v939
        %v1069 = vmul.f32 %v940, %v940
        %v1070 = vmul.f32 %v941, %v941
        %v1071 = vmul.f32 %v942, %v942
        %v1072 = vmul.f32 %v943, %v943
        %v1073 = vmul.f32 %v944, %v944
        %v1074 = vmul.f32 %v945, %v945
        %v1075 = vmul.f32 %v946, %v946
        %v1076 = vmul.f32 %v947, %v947
        %v1077 = vmul.f32 %v948, %v948
        %v1078 = vmul.f32 %v949, %v949
        %v1079 = vmul.f32 %v950, %v950
        %v1080 = vmul.f32 %v951, %v951
        %v1081 = vmul.f32 %v952, %v952
        %v1082 = vmul.f32 %v953, %v953
        %v1083 = vmul.f32 %v954, %v954
        %v1084 = vmul.f32 %v955, %v955
        %v1085 = vmul.f32 %v956, %v956
        %v1086 = vmul.f32 %v957, %v957
        %v1087 = vmul.f32 %v958, %v958
        %v1088 = vmul.f32 %v959, %v959
        %v1089 = vmul.f32 %v960, %v960
        %v1090 = vsel %vm961, %v1058, 0.0
        %1091 = vadd.xlane.f32.xlu0 %v1090
        %v1092 = vpop.xlane.xlu0 %1091
        %v1093 = vsel %vm961, %v1059, 0.0
        %1094 = vadd.xlane.f32.xlu0 %v1093
        %v1095 = vpop.xlane.xlu0 %1094
        %v1096 = vsel %vm961, %v1060, 0.0
        %1097 = vadd.xlane.f32.xlu0 %v1096
        %v1098 = vpop.xlane.xlu0 %1097
        %v1099 = vsel %vm961, %v1061, 0.0
        %1100 = vadd.xlane.f32.xlu0 %v1099
        %v1101 = vpop.xlane.xlu0 %1100
        %v1102 = vsel %vm961, %v1062, 0.0
        %1103 = vadd.xlane.f32.xlu0 %v1102
        %v1104 = vpop.xlane.xlu0 %1103
        %v1105 = vsel %vm961, %v1063, 0.0
        %1106 = vadd.xlane.f32.xlu0 %v1105
        %v1107 = vpop.xlane.xlu0 %1106
        %v1108 = vsel %vm961, %v1064, 0.0
        %1109 = vadd.xlane.f32.xlu0 %v1108
        %v1110 = vpop.xlane.xlu0 %1109
        %v1111 = vsel %vm961, %v1065, 0.0
        %1112 = vadd.xlane.f32.xlu0 %v1111
        %v1113 = vpop.xlane.xlu0 %1112
        %v1114 = vsel %vm961, %v1066, 0.0
        %1115 = vadd.xlane.f32.xlu0 %v1114
        %v1116 = vpop.xlane.xlu0 %1115
        %v1117 = vsel %vm961, %v1067, 0.0
        %1118 = vadd.xlane.f32.xlu0 %v1117
        %v1119 = vpop.xlane.xlu0 %1118
        %v1120 = vsel %vm961, %v1068, 0.0
        %1121 = vadd.xlane.f32.xlu0 %v1120
        %v1122 = vpop.xlane.xlu0 %1121
        %v1123 = vsel %vm961, %v1069, 0.0
        %1124 = vadd.xlane.f32.xlu0 %v1123
        %v1125 = vpop.xlane.xlu0 %1124
        %v1126 = vsel %vm961, %v1070, 0.0
        %1127 = vadd.xlane.f32.xlu0 %v1126
        %v1128 = vpop.xlane.xlu0 %1127
        %v1129 = vsel %vm961, %v1071, 0.0
        %1130 = vadd.xlane.f32.xlu0 %v1129
        %v1131 = vpop.xlane.xlu0 %1130
        %v1132 = vsel %vm961, %v1072, 0.0
        %1133 = vadd.xlane.f32.xlu0 %v1132
        %v1134 = vpop.xlane.xlu0 %1133
        %v1135 = vsel %vm961, %v1073, 0.0
        %1136 = vadd.xlane.f32.xlu0 %v1135
        %v1137 = vpop.xlane.xlu0 %1136
        %v1138 = vsel %vm961, %v1074, 0.0
        %1139 = vadd.xlane.f32.xlu0 %v1138
        %v1140 = vpop.xlane.xlu0 %1139
        %v1141 = vsel %vm961, %v1075, 0.0
        %1142 = vadd.xlane.f32.xlu0 %v1141
        %v1143 = vpop.xlane.xlu0 %1142
        %v1144 = vsel %vm961, %v1076, 0.0
        %1145 = vadd.xlane.f32.xlu0 %v1144
        %v1146 = vpop.xlane.xlu0 %1145
        %v1147 = vsel %vm961, %v1077, 0.0
        %1148 = vadd.xlane.f32.xlu0 %v1147
        %v1149 = vpop.xlane.xlu0 %1148
        %v1150 = vsel %vm961, %v1078, 0.0
        %1151 = vadd.xlane.f32.xlu0 %v1150
        %v1152 = vpop.xlane.xlu0 %1151
        %v1153 = vsel %vm961, %v1079, 0.0
        %1154 = vadd.xlane.f32.xlu0 %v1153
        %v1155 = vpop.xlane.xlu0 %1154
        %v1156 = vsel %vm961, %v1080, 0.0
        %1157 = vadd.xlane.f32.xlu0 %v1156
        %v1158 = vpop.xlane.xlu0 %1157
        %v1159 = vsel %vm961, %v1081, 0.0
        %1160 = vadd.xlane.f32.xlu0 %v1159
        %v1161 = vpop.xlane.xlu0 %1160
        %v1162 = vsel %vm961, %v1082, 0.0
        %1163 = vadd.xlane.f32.xlu0 %v1162
        %v1164 = vpop.xlane.xlu0 %1163
        %v1165 = vsel %vm961, %v1083, 0.0
        %1166 = vadd.xlane.f32.xlu0 %v1165
        %v1167 = vpop.xlane.xlu0 %1166
        %v1168 = vsel %vm961, %v1084, 0.0
        %1169 = vadd.xlane.f32.xlu0 %v1168
        %v1170 = vpop.xlane.xlu0 %1169
        %v1171 = vsel %vm961, %v1085, 0.0
        %1172 = vadd.xlane.f32.xlu0 %v1171
        %v1173 = vpop.xlane.xlu0 %1172
        %v1174 = vsel %vm961, %v1086, 0.0
        %1175 = vadd.xlane.f32.xlu0 %v1174
        %v1176 = vpop.xlane.xlu0 %1175
        %v1177 = vsel %vm961, %v1087, 0.0
        %1178 = vadd.xlane.f32.xlu0 %v1177
        %v1179 = vpop.xlane.xlu0 %1178
        %v1180 = vsel %vm961, %v1088, 0.0
        %1181 = vadd.xlane.f32.xlu0 %v1180
        %v1182 = vpop.xlane.xlu0 %1181
        %v1183 = vsel %vm961, %v1089, 0.0
        %1184 = vadd.xlane.f32.xlu0 %v1183
        %v1185 = vpop.xlane.xlu0 %1184
        %vm1186 = vcmask 1043456
        %v1187 = vsel %vm1186, %v964, 0.0
        %v1188 = vsel %vm1186, %v967, 0.0
        %v1189 = vadd.f32 %v1187, %v1188
        %v1190 = vsel %vm1186, %v970, 0.0
        %v1191 = vadd.f32 %v1189, %v1190
        %v1192 = vsel %vm1186, %v973, 0.0
        %v1193 = vadd.f32 %v1191, %v1192
        %v1194 = vsel %vm1186, %v976, 0.0
        %v1195 = vadd.f32 %v1193, %v1194
        %v1196 = vsel %vm1186, %v979, 0.0
        %v1197 = vadd.f32 %v1195, %v1196
        %v1198 = vsel %vm1186, %v982, 0.0
        %v1199 = vadd.f32 %v1197, %v1198
        %v1200 = vsel %vm1186, %v985, 0.0
        %v1201 = vadd.f32 %v1199, %v1200
        %v1202 = vsel %vm1186, %v988, 0.0
        %v1203 = vadd.f32 %v1201, %v1202
        %v1204 = vsel %vm1186, %v991, 0.0
        %v1205 = vadd.f32 %v1203, %v1204
        %v1206 = vsel %vm1186, %v994, 0.0
        %v1207 = vadd.f32 %v1205, %v1206
        %v1208 = vsel %vm1186, %v997, 0.0
        %v1209 = vadd.f32 %v1207, %v1208
        %v1210 = vsel %vm1186, %v1000, 0.0
        %v1211 = vadd.f32 %v1209, %v1210
        %v1212 = vsel %vm1186, %v1003, 0.0
        %v1213 = vadd.f32 %v1211, %v1212
        %v1214 = vsel %vm1186, %v1006, 0.0
        %v1215 = vadd.f32 %v1213, %v1214
        %v1216 = vsel %vm1186, %v1009, 0.0
        %v1217 = vadd.f32 %v1215, %v1216
        %v1218 = vsel %vm1186, %v1012, 0.0
        %v1219 = vadd.f32 %v1217, %v1218
        %v1220 = vsel %vm1186, %v1015, 0.0
        %v1221 = vadd.f32 %v1219, %v1220
        %v1222 = vsel %vm1186, %v1018, 0.0
        %v1223 = vadd.f32 %v1221, %v1222
        %v1224 = vsel %vm1186, %v1021, 0.0
        %v1225 = vadd.f32 %v1223, %v1224
        %v1226 = vsel %vm1186, %v1024, 0.0
        %v1227 = vadd.f32 %v1225, %v1226
        %v1228 = vsel %vm1186, %v1027, 0.0
        %v1229 = vadd.f32 %v1227, %v1228
        %v1230 = vsel %vm1186, %v1030, 0.0
        %v1231 = vadd.f32 %v1229, %v1230
        %v1232 = vsel %vm1186, %v1033, 0.0
        %v1233 = vadd.f32 %v1231, %v1232
        %v1234 = vsel %vm1186, %v1036, 0.0
        %v1235 = vadd.f32 %v1233, %v1234
        %v1236 = vsel %vm1186, %v1039, 0.0
        %v1237 = vadd.f32 %v1235, %v1236
        %v1238 = vsel %vm1186, %v1042, 0.0
        %v1239 = vadd.f32 %v1237, %v1238
        %v1240 = vsel %vm1186, %v1045, 0.0
        %v1241 = vadd.f32 %v1239, %v1240
        %v1242 = vsel %vm1186, %v1048, 0.0
        %v1243 = vadd.f32 %v1241, %v1242
        %v1244 = vsel %vm1186, %v1051, 0.0
        %v1245 = vadd.f32 %v1243, %v1244
        %v1246 = vsel %vm1186, %v1054, 0.0
        %v1247 = vadd.f32 %v1245, %v1246
        %v1248 = vsel %vm1186, %v1057, 0.0
        %v1249 = vadd.f32 %v1247, %v1248
        %v1250 = vmul.f32 %v1249, 0.0009765625
        %v1251 = vsel %vm1186, %v1092, 0.0
        %v1252 = vsel %vm1186, %v1095, 0.0
        %v1253 = vadd.f32 %v1251, %v1252
        %v1254 = vsel %vm1186, %v1098, 0.0
        %v1255 = vadd.f32 %v1253, %v1254
        %v1256 = vsel %vm1186, %v1101, 0.0
        %v1257 = vadd.f32 %v1255, %v1256
        %v1258 = vsel %vm1186, %v1104, 0.0
        %v1259 = vadd.f32 %v1257, %v1258
        %v1260 = vsel %vm1186, %v1107, 0.0
        %v1261 = vadd.f32 %v1259, %v1260
        %v1262 = vsel %vm1186, %v1110, 0.0
        %v1263 = vadd.f32 %v1261, %v1262
        %v1264 = vsel %vm1186, %v1113, 0.0
        %v1265 = vadd.f32 %v1263, %v1264
        %v1266 = vsel %vm1186, %v1116, 0.0
        %v1267 = vadd.f32 %v1265, %v1266
        %v1268 = vsel %vm1186, %v1119, 0.0
        %v1269 = vadd.f32 %v1267, %v1268
        %v1270 = vsel %vm1186, %v1122, 0.0
        %v1271 = vadd.f32 %v1269, %v1270
        %v1272 = vsel %vm1186, %v1125, 0.0
        %v1273 = vadd.f32 %v1271, %v1272
        %v1274 = vsel %vm1186, %v1128, 0.0
        %v1275 = vadd.f32 %v1273, %v1274
        %v1276 = vsel %vm1186, %v1131, 0.0
        %v1277 = vadd.f32 %v1275, %v1276
        %v1278 = vsel %vm1186, %v1134, 0.0
        %v1279 = vadd.f32 %v1277, %v1278
        %v1280 = vsel %vm1186, %v1137, 0.0
        %v1281 = vadd.f32 %v1279, %v1280
        %v1282 = vsel %vm1186, %v1140, 0.0
        %v1283 = vadd.f32 %v1281, %v1282
        %v1284 = vsel %vm1186, %v1143, 0.0
        %v1285 = vadd.f32 %v1283, %v1284
        %v1286 = vsel %vm1186, %v1146, 0.0
        %v1287 = vadd.f32 %v1285, %v1286
        %v1288 = vsel %vm1186, %v1149, 0.0
        %v1289 = vadd.f32 %v1287, %v1288
        %v1290 = vsel %vm1186, %v1152, 0.0
        %v1291 = vadd.f32 %v1289, %v1290
        %v1292 = vsel %vm1186, %v1155, 0.0
        %v1293 = vadd.f32 %v1291, %v1292
        %v1294 = vsel %vm1186, %v1158, 0.0
        %v1295 = vadd.f32 %v1293, %v1294
        %v1296 = vsel %vm1186, %v1161, 0.0
        %v1297 = vadd.f32 %v1295, %v1296
        %v1298 = vsel %vm1186, %v1164, 0.0
        %v1299 = vadd.f32 %v1297, %v1298
        %v1300 = vsel %vm1186, %v1167, 0.0
        %v1301 = vadd.f32 %v1299, %v1300
        %v1302 = vsel %vm1186, %v1170, 0.0
        %v1303 = vadd.f32 %v1301, %v1302
        %v1304 = vsel %vm1186, %v1173, 0.0
        %v1305 = vadd.f32 %v1303, %v1304
        %v1306 = vsel %vm1186, %v1176, 0.0
        %v1307 = vadd.f32 %v1305, %v1306
        %v1308 = vsel %vm1186, %v1179, 0.0
        %v1309 = vadd.f32 %v1307, %v1308
        %v1310 = vsel %vm1186, %v1182, 0.0
        %v1311 = vadd.f32 %v1309, %v1310
        %v1312 = vsel %vm1186, %v1185, 0.0
        %v1313 = vadd.f32 %v1311, %v1312
        %v1314 = vmul.f32 %v1313, 0.0009765625
        %v1315 = vmul.f32 %v1250, %v1250
        %v1316 = vsub.f32 %v1314, %v1315
        %v1317 = vmax.f32 %v1316, 0.0
        %v1318 = vsub.f32 %v929, %v1250
        %v1319 = vsub.f32 %v930, %v1250
        %v1320 = vsub.f32 %v931, %v1250
        %v1321 = vsub.f32 %v932, %v1250
        %v1322 = vsub.f32 %v933, %v1250
        %v1323 = vsub.f32 %v934, %v1250
        %v1324 = vsub.f32 %v935, %v1250
        %v1325 = vsub.f32 %v936, %v1250
        %v1326 = vsub.f32 %v937, %v1250
        %v1327 = vsub.f32 %v938, %v1250
        %v1328 = vsub.f32 %v939, %v1250
        %v1329 = vsub.f32 %v940, %v1250
        %v1330 = vsub.f32 %v941, %v1250
        %v1331 = vsub.f32 %v942, %v1250
        %v1332 = vsub.f32 %v943, %v1250
        %v1333 = vsub.f32 %v944, %v1250
        %v1334 = vsub.f32 %v945, %v1250
        %v1335 = vsub.f32 %v946, %v1250
        %v1336 = vsub.f32 %v947, %v1250
        %v1337 = vsub.f32 %v948, %v1250
        %v1338 = vsub.f32 %v949, %v1250
        %v1339 = vsub.f32 %v950, %v1250
        %v1340 = vsub.f32 %v951, %v1250
        %v1341 = vsub.f32 %v952, %v1250
        %v1342 = vsub.f32 %v953, %v1250
        %v1343 = vsub.f32 %v954, %v1250
        %v1344 = vsub.f32 %v955, %v1250
        %v1345 = vsub.f32 %v956, %v1250
        %v1346 = vsub.f32 %v957, %v1250
        %v1347 = vsub.f32 %v958, %v1250
        %v1348 = vsub.f32 %v959, %v1250
        %v1349 = vsub.f32 %v960, %v1250
        %v1350 = vadd.f32 %v1317, 1e-05
        %v1351 = vrsqrt.pop %v1350
        %v1352 = vmul.f32 %v1318, %v1351
        %v1353 = vmul.f32 %v1319, %v1351
        %v1354 = vmul.f32 %v1320, %v1351
        %v1355 = vmul.f32 %v1321, %v1351
        %v1356 = vmul.f32 %v1322, %v1351
        %v1357 = vmul.f32 %v1323, %v1351
        %v1358 = vmul.f32 %v1324, %v1351
        %v1359 = vmul.f32 %v1325, %v1351
        %v1360 = vmul.f32 %v1326, %v1351
        %v1361 = vmul.f32 %v1327, %v1351
        %v1362 = vmul.f32 %v1328, %v1351
        %v1363 = vmul.f32 %v1329, %v1351
        %v1364 = vmul.f32 %v1330, %v1351
        %v1365 = vmul.f32 %v1331, %v1351
        %v1366 = vmul.f32 %v1332, %v1351
        %v1367 = vmul.f32 %v1333, %v1351
        %v1368 = vmul.f32 %v1334, %v1351
        %v1369 = vmul.f32 %v1335, %v1351
        %v1370 = vmul.f32 %v1336, %v1351
        %v1371 = vmul.f32 %v1337, %v1351
        %v1372 = vmul.f32 %v1338, %v1351
        %v1373 = vmul.f32 %v1339, %v1351
        %v1374 = vmul.f32 %v1340, %v1351
        %v1375 = vmul.f32 %v1341, %v1351
        %v1376 = vmul.f32 %v1342, %v1351
        %v1377 = vmul.f32 %v1343, %v1351
        %v1378 = vmul.f32 %v1344, %v1351
        %v1379 = vmul.f32 %v1345, %v1351
        %v1380 = vmul.f32 %v1346, %v1351
        %v1381 = vmul.f32 %v1347, %v1351
        %v1382 = vmul.f32 %v1348, %v1351
        %v1383 = vmul.f32 %v1349, %v1351
        %v1384 = vmax.f32 %v1352, 0.0
        %v1385 = vmax.f32 %v1353, 0.0
        %v1386 = vmax.f32 %v1354, 0.0
        %v1387 = vmax.f32 %v1355, 0.0
        %v1388 = vmax.f32 %v1356, 0.0
        %v1389 = vmax.f32 %v1357, 0.0
        %v1390 = vmax.f32 %v1358, 0.0
        %v1391 = vmax.f32 %v1359, 0.0
        %v1392 = vmax.f32 %v1360, 0.0
        %v1393 = vmax.f32 %v1361, 0.0
        %v1394 = vmax.f32 %v1362, 0.0
        %v1395 = vmax.f32 %v1363, 0.0
        %v1396 = vmax.f32 %v1364, 0.0
        %v1397 = vmax.f32 %v1365, 0.0
        %v1398 = vmax.f32 %v1366, 0.0
        %v1399 = vmax.f32 %v1367, 0.0
        %v1400 = vmax.f32 %v1368, 0.0
        %v1401 = vmax.f32 %v1369, 0.0
        %v1402 = vmax.f32 %v1370, 0.0
        %v1403 = vmax.f32 %v1371, 0.0
        %v1404 = vmax.f32 %v1372, 0.0
        %v1405 = vmax.f32 %v1373, 0.0
        %v1406 = vmax.f32 %v1374, 0.0
        %v1407 = vmax.f32 %v1375, 0.0
        %v1408 = vmax.f32 %v1376, 0.0
        %v1409 = vmax.f32 %v1377, 0.0
        %v1410 = vmax.f32 %v1378, 0.0
        %v1411 = vmax.f32 %v1379, 0.0
        %v1412 = vmax.f32 %v1380, 0.0
        %v1413 = vmax.f32 %v1381, 0.0
        %v1414 = vmax.f32 %v1382, 0.0
        %v1415 = vmax.f32 %v1383, 0.0
        %1416 = vst.msk [vmem:[%s188] sm:$0xf] %vm961, %v1384
        %1417 = vst.msk [vmem:[%s188 + $0x4] sm:$0xf] %vm961, %v1385
        %1418 = vst.msk [vmem:[%s188 + $0x8] sm:$0xf] %vm961, %v1386
        %1419 = vst.msk [vmem:[%s188 + $0xc] sm:$0xf] %vm961, %v1387
        %1420 = vst.msk [vmem:[%s188 + $0x10] sm:$0xf] %vm961, %v1388
        %1421 = vst.msk [vmem:[%s188 + $0x14] sm:$0xf] %vm961, %v1389
        %1422 = vst.msk [vmem:[%s188 + $0x18] sm:$0xf] %vm961, %v1390
        %1423 = vst.msk [vmem:[%s188 + $0x1c] sm:$0xf] %vm961, %v1391
        %1424 = vst.msk [vmem:[%s188 + $0x20] sm:$0xf] %vm961, %v1392
        %1425 = vst.msk [vmem:[%s188 + $0x24] sm:$0xf] %vm961, %v1393
        %1426 = vst.msk [vmem:[%s188 + $0x28] sm:$0xf] %vm961, %v1394
        %1427 = vst.msk [vmem:[%s188 + $0x2c] sm:$0xf] %vm961, %v1395
        %1428 = vst.msk [vmem:[%s188 + $0x30] sm:$0xf] %vm961, %v1396
        %1429 = vst.msk [vmem:[%s188 + $0x34] sm:$0xf] %vm961, %v1397
        %1430 = vst.msk [vmem:[%s188 + $0x38] sm:$0xf] %vm961, %v1398
        %1431 = vst.msk [vmem:[%s188 + $0x3c] sm:$0xf] %vm961, %v1399
        %1432 = vst.msk [vmem:[%s188 + $0x40] sm:$0xf] %vm961, %v1400
        %1433 = vst.msk [vmem:[%s188 + $0x44] sm:$0xf] %vm961, %v1401
        %1434 = vst.msk [vmem:[%s188 + $0x48] sm:$0xf] %vm961, %v1402
        %1435 = vst.msk [vmem:[%s188 + $0x4c] sm:$0xf] %vm961, %v1403
        %1436 = vst.msk [vmem:[%s188 + $0x50] sm:$0xf] %vm961, %v1404
        %1437 = vst.msk [vmem:[%s188 + $0x54] sm:$0xf] %vm961, %v1405
        %1438 = vst.msk [vmem:[%s188 + $0x58] sm:$0xf] %vm961, %v1406
        %1439 = vst.msk [vmem:[%s188 + $0x5c] sm:$0xf] %vm961, %v1407
        %1440 = vst.msk [vmem:[%s188 + $0x60] sm:$0xf] %vm961, %v1408
        %1441 = vst.msk [vmem:[%s188 + $0x64] sm:$0xf] %vm961, %v1409
        %1442 = vst.msk [vmem:[%s188 + $0x68] sm:$0xf] %vm961, %v1410
        %1443 = vst.msk [vmem:[%s188 + $0x6c] sm:$0xf] %vm961, %v1411
        %1444 = vst.msk [vmem:[%s188 + $0x70] sm:$0xf] %vm961, %v1412
        %1445 = vst.msk [vmem:[%s188 + $0x74] sm:$0xf] %vm961, %v1413
        %1446 = vst.msk [vmem:[%s188 + $0x78] sm:$0xf] %vm961, %v1414
        %1447 = vst.msk [vmem:[%s188 + $0x7c] sm:$0xf] %vm961, %v1415
        %s1448 = sand.u32 %s93, 1
        %s1449 = scalar_lea.sflag [#allocation4], %s1448
        %s1450 = sand.u32 %s93, 1
        %s1451 = smul.addr %s1450, 128
        %s1452 = scalar_lea.vmem [#allocation5], %s1451
        // Predicated region
        $region40: #{tpu_custom_call.1} parent=27 // pred_check
          %p1453 = pneg %p103
        $region41: #{tpu_custom_call.1} parent=27 // pred_check_branch
          %1455 = sbr.rel (%p1453) target = $region43
        $region42: #{tpu_custom_call.1} parent=27 // pred_region
          %s1457 = ssub.s32 2048, 2048
          %1458 = vsyncadd %s1449, %s1457
          %s1459 = smul.addr %s23, 32
          %s1460 = sadd.s32 %s24, %s1459
          %s1461 = smul.addr %s1460, 64
          %s1462 = scalar_lea.hbm %s2, %s1461
          %s1463 = sshll.u32 %s1452, 4
          %s1464 = int_to_ptr.vmem [resolvable:$true] %s1463
          %1469 = dma.vmem_to_hbm [thread:$0]  %s1464, 2048, %s1462, %s1449, 64, 64, 4
        $region43: #{tpu_custom_call.1} parent=27 // pred_fallthru
          _
      $region28: #{tpu_custom_call.1} parent=5 // pred_fallthru
        _
      %p1470 = scmp.le.s32.totalorder 2, %s14
      // Predicated region
      $region44: #{tpu_custom_call.1} parent=5 // pred_check
        %p1471 = pneg %p1470
      $region45: #{tpu_custom_call.1} parent=5 // pred_check_branch
        %1473 = sbr.rel (%p1471) target = $region47
      $region46: #{tpu_custom_call.1} parent=5 // pred_region
        %s1474 = ssub.s32 %s14, 2
        // Predicated region
        $region48: #{tpu_custom_call.1} parent=46 // pred_check
          %p1475 = pneg %p109
        $region49: #{tpu_custom_call.1} parent=46 // pred_check_branch
          %1477 = sbr.rel (%p1475) target = $region51
        $region50: #{tpu_custom_call.1} parent=46 // pred_region
          %s1478 = sand.u32 %s94, 1
          %s1479 = scalar_lea.sflag [#allocation4], %s1478
          %s1480 = sand.u32 %s94, 1
          %s1481 = smul.addr %s1480, 128
          %s1482 = scalar_lea.vmem [#allocation5], %s1481
          %1483 = dma.done %s1479, 2048
        $region51: #{tpu_custom_call.1} parent=46 // pred_fallthru
          _
      $region47: #{tpu_custom_call.1} parent=5 // pred_fallthru
        _
    $region6: #{tpu_custom_call.1} parent=1 // loop_footer
      %s18 = sadd.s32 1, %s14
    $region7: #{tpu_custom_call.1} parent=1 // loop_footer_branch
      %13 = sbr.rel target = $region3
    $region8: #{tpu_custom_call.1} parent=1 // loop_exit
      _
    %1484 = vsyncpa [#allocation3], 1
    %s1485 = scalar_lea.sflag [#allocation3], 1
    %1486 = vsyncpa %s1485, 1
    %1487 = vsyncpa [#allocation4], 1
    %s1488 = scalar_lea.sflag [#allocation4], 1
    %1489 = vsyncpa %s1488, 1

</llo_original>
